<compile_context>
chip_gen: v7x
topology: tpu7x:2x2x1
jax: 0.10.0
libtpu: 0.0.40
codegen_flags: <defaults>
</compile_context>

<pallas_src>
import functools

import jax
import jax.numpy as jnp
from jax import lax
from jax.experimental import pallas as pl
from jax.experimental.pallas import tpu as pltpu


def _mha_kernel(q_ref, k_ref, wq_ref, wk_ref, wv_ref, o_ref, *,
                num_heads, scale, mxu_dtype):
    # q_ref:  (NB, T_q, query_dim)        k_ref: (NB, T_k, key_dim)
    # wq_ref: (num_units, query_dim)      wk_ref/wv_ref: (num_units, key_dim)
    # o_ref:  (1, NB, T_q * num_units)    (lane-dense output slab)
    nb, t_q, q_dim = q_ref.shape
    _, t_k, k_dim = k_ref.shape
    num_units = wq_ref.shape[0]
    d = num_units // num_heads

    cast = (lambda x: x) if mxu_dtype is None else (lambda x: x.astype(mxu_dtype))

    # Flatten the NB examples into the matmul row dimension so the three fused
    # (all-head) projections each run as ONE fat MXU matmul per grid step.
    q = cast(q_ref[...].reshape(nb * t_q, q_dim))
    k = cast(k_ref[...].reshape(nb * t_k, k_dim))

    # nn.Linear stores W as (out, in); contract the in-feature dim directly instead
    # of materializing W.T in the wrapper. Fold the 1/sqrt(key_dim) softmax scale
    # into q_proj (smallest tile) rather than the (T_q, T_k) score tiles.
    dn = (((1,), (1,)), ((), ()))
    q_proj = lax.dot_general(q, cast(wq_ref[...]), dn,
                             preferred_element_type=jnp.float32) * scale
    k_proj = lax.dot_general(k, cast(wk_ref[...]), dn,
                             preferred_element_type=jnp.float32)
    v_proj = lax.dot_general(k, cast(wv_ref[...]), dn,
                             preferred_element_type=jnp.float32)

    # Back to (batch, time, features); leading-dim reshapes are layout-cheap.
    q3 = q_proj.reshape(nb, t_q, num_units)
    k3 = k_proj.reshape(nb, t_k, num_units)
    v3 = v_proj.reshape(nb, t_k, num_units)

    # Per-head attention, batched over the NB examples of this grid step.
    # Head h uses feature columns [h*d:(h+1)*d], exactly as torch.split(..., dim=2).
    head_outs = []
    for h in range(num_heads):
        lo = h * d
        qh = q3[:, :, lo:lo + d]                                   # (NB, T_q, d)
        kh = k3[:, :, lo:lo + d]                                   # (NB, T_k, d)
        vh = v3[:, :, lo:lo + d]                                   # (NB, T_k, d)

        s = jnp.einsum("bqd,bkd->bqk", qh, kh,
                       preferred_element_type=jnp.float32)         # (NB, T_q, T_k)
        # Softmax over T_k, all math in f32 (v5e has no bf16 VPU/EUP); exact divide.
        s = s - jnp.max(s, axis=-1, keepdims=True)
        p = jnp.exp(s)
        p = p / jnp.sum(p, axis=-1, keepdims=True)

        head_outs.append(
            jnp.einsum("bqk,bkd->bqd", cast(p), cast(vh),
                       preferred_element_type=jnp.float32))        # (NB, T_q, d)

    # torch.cat(torch.split(out, 1, dim=0), dim=3).squeeze(0): head h lands at
    # feature columns [h*d:(h+1)*d]. Flatten (T_q, num_units) per example so the
    # store is a single lane-dense slab instead of masked 32-lane partial stores.
    out = jnp.concatenate(head_outs, axis=-1)                      # (NB, T_q, U)
    o_ref[0] = out.reshape(nb, t_q * num_units).astype(o_ref.dtype)


def _pick_batches_per_step(n):
    """Largest per-step batch that still leaves >=2 grid steps (v7x has 2 TCs)."""
    if n <= 1:
        return 1
    nb = n // 2
    while n % nb:
        nb -= 1
    return max(nb, 1)


def multi_head_attention(query, key, w_query, w_key, w_value, num_heads, key_dim,
                         *, batches_per_step=None, mxu_dtype=None):
    """Pallas implementation of MultiHeadAttention.forward.

    query:   [N, T_q, query_dim]
    key:     [N, T_k, key_dim]
    w_query: [num_units, query_dim]   (PyTorch nn.Linear (out, in) layout, used as-is)
    w_key:   [num_units, key_dim]
    w_value: [num_units, key_dim]
    returns: [N, T_q, num_units]
    """
    n, t_q, q_dim = query.shape
    _, t_k, k_dim = key.shape
    num_units = w_query.shape[0]
    assert num_units % num_heads == 0, "num_units must be divisible by num_heads"
    scale = 1.0 / (float(key_dim) ** 0.5)

    nb = batches_per_step if batches_per_step is not None else _pick_batches_per_step(n)
    assert n % nb == 0, (n, nb)
    num_steps = n // nb

    out = pl.pallas_call(
        functools.partial(_mha_kernel, num_heads=num_heads, scale=scale,
                          mxu_dtype=mxu_dtype),
        # Lane-dense output layout: one (NB, T_q*num_units) slab per grid step.
        out_shape=jax.ShapeDtypeStruct((num_steps, nb, t_q * num_units), jnp.float32),
        grid_spec=pltpu.PrefetchScalarGridSpec(
            num_scalar_prefetch=0,
            grid=(num_steps,),
            in_specs=[
                pl.BlockSpec((nb, t_q, q_dim), lambda s: (s, 0, 0)),    # query block
                pl.BlockSpec((nb, t_k, k_dim), lambda s: (s, 0, 0)),    # key block
                pl.BlockSpec((num_units, q_dim), lambda s: (0, 0)),     # Wq (constant index -> no re-DMA)
                pl.BlockSpec((num_units, k_dim), lambda s: (0, 0)),     # Wk
                pl.BlockSpec((num_units, k_dim), lambda s: (0, 0)),     # Wv
            ],
            out_specs=pl.BlockSpec((1, nb, t_q * num_units), lambda s: (s, 0, 0)),
        ),
        compiler_params=pltpu.CompilerParams(
            dimension_semantics=("parallel",)),
    )(query, key, w_query, w_key, w_value)

    # Contiguous reshape back to [N, T_q, num_units] (no data movement).
    return out.reshape(n, t_q, num_units)


def _reference(query, key, w_query, w_key, w_value, num_heads, key_dim):
    """Pure-JAX reference mirroring the PyTorch forward."""
    num_units = w_query.shape[0]
    d = num_units // num_heads
    qs = query @ w_query.T                      # [N, T_q, U]
    ks = key @ w_key.T                          # [N, T_k, U]
    vs = key @ w_value.T                        # [N, T_k, U]

    def split_heads(x):                         # -> [H, N, T, d]
        return jnp.stack(jnp.split(x, num_units // d, axis=2), axis=0)

    qs, ks, vs = split_heads(qs), split_heads(ks), split_heads(vs)
    scores = jnp.einsum("hnqd,hnkd->hnqk", qs, ks) / (float(key_dim) ** 0.5)
    scores = jax.nn.softmax(scores, axis=3)
    out = jnp.einsum("hnqk,hnkd->hnqd", scores, vs)
    return jnp.transpose(out, (1, 2, 0, 3)).reshape(query.shape[0], query.shape[1], num_units)


if __name__ == "__main__":
    # Small shapes consistent with the module. N=4 so the default tiling gives
    # 2 grid steps of 2 examples each (both v7x TensorCores stay busy).
    N, T_q, T_k = 4, 8, 8
    query_dim, key_dim = 16, 16
    num_units, num_heads = 32, 4

    root = jax.random.PRNGKey(0)
    k_q, k_k, k_wq, k_wk, k_wv = jax.random.split(root, 5)

    query = jax.random.normal(k_q, (N, T_q, query_dim), dtype=jnp.float32)
    key = jax.random.normal(k_k, (N, T_k, key_dim), dtype=jnp.float32)

    # Deterministic synthetic parameters (PyTorch nn.Linear layout: [out, in]).
    w_query = jax.random.normal(k_wq, (num_units, query_dim), dtype=jnp.float32) * 0.1
    w_key = jax.random.normal(k_wk, (num_units, key_dim), dtype=jnp.float32) * 0.1
    w_value = jax.random.normal(k_wv, (num_units, key_dim), dtype=jnp.float32) * 0.1

    out = multi_head_attention(query, key, w_query, w_key, w_value, num_heads, key_dim)
    out = jax.block_until_ready(out)

    ref = _reference(query, key, w_query, w_key, w_value, num_heads, key_dim)
    assert out.shape == (N, T_q, num_units), out.shape
    assert jnp.allclose(out, ref, atol=1e-4, rtol=1e-4), float(jnp.max(jnp.abs(out - ref)))

    print("KERNEL_OK")
</pallas_src>

<mosaic_0001>
module attributes {stable_mosaic.version = 11 : i64} {
  func.func @_mha_kernel(%arg0: i32, %arg1: memref<2x8x16xf32, #tpu.memory_space<vmem>>, %arg2: memref<2x8x16xf32, #tpu.memory_space<vmem>>, %arg3: memref<32x16xf32, #tpu.memory_space<vmem>>, %arg4: memref<32x16xf32, #tpu.memory_space<vmem>>, %arg5: memref<32x16xf32, #tpu.memory_space<vmem>>, %arg6: memref<1x2x256xf32, #tpu.memory_space<vmem>>) attributes {dimension_semantics = [#tpu.dimension_semantics<parallel>], iteration_bounds = array<i64: 2>, scalar_prefetch = 0 : i64, scratch_operands = 0 : i64, tpu.core_type = #tpu.core_type<tc>, window_params = [{transform_indices = @transform_0, window_bounds = array<i64: 2, 8, 16>}, {transform_indices = @transform_1, window_bounds = array<i64: 2, 8, 16>}, {pipeline_mode = #tpu.pipeline_mode<synchronous>, transform_indices = @transform_2, window_bounds = array<i64: 32, 16>}, {pipeline_mode = #tpu.pipeline_mode<synchronous>, transform_indices = @transform_3, window_bounds = array<i64: 32, 16>}, {pipeline_mode = #tpu.pipeline_mode<synchronous>, transform_indices = @transform_4, window_bounds = array<i64: 32, 16>}, {transform_indices = @transform_5, window_bounds = array<i64: 1, 2, 256>}]} {
    %c0 = arith.constant 0 : index
    %c0_0 = arith.constant 0 : index
    %c0_1 = arith.constant 0 : index
    %0 = vector.load %arg1[%c0, %c0_0, %c0_1] : memref<2x8x16xf32, #tpu.memory_space<vmem>>, vector<2x8x16xf32>
    %1 = vector.shape_cast %0 : vector<2x8x16xf32> to vector<16x16xf32>
    %c0_2 = arith.constant 0 : index
    %c0_3 = arith.constant 0 : index
    %c0_4 = arith.constant 0 : index
    %2 = vector.load %arg2[%c0_2, %c0_3, %c0_4] : memref<2x8x16xf32, #tpu.memory_space<vmem>>, vector<2x8x16xf32>
    %3 = vector.shape_cast %2 : vector<2x8x16xf32> to vector<16x16xf32>
    %c0_5 = arith.constant 0 : index
    %c0_6 = arith.constant 0 : index
    %4 = vector.load %arg3[%c0_5, %c0_6] : memref<32x16xf32, #tpu.memory_space<vmem>>, vector<32x16xf32>
    %cst = arith.constant dense<0.000000e+00> : vector<16x32xf32>
    %5 = tpu.matmul %1, %4, %cst {dimension_numbers = #tpu.dot_dimension_numbers<[1], [1], [0], [0], [0, 0, 1, 0], [], []>} : vector<16x16xf32>, vector<32x16xf32>, vector<16x32xf32> -> vector<16x32xf32>
    %cst_7 = arith.constant 2.500000e-01 : f32
    %6 = vector.broadcast %cst_7 : f32 to vector<16x32xf32>
    %7 = arith.mulf %5, %6 : vector<16x32xf32>
    %c0_8 = arith.constant 0 : index
    %c0_9 = arith.constant 0 : index
    %8 = vector.load %arg4[%c0_8, %c0_9] : memref<32x16xf32, #tpu.memory_space<vmem>>, vector<32x16xf32>
    %cst_10 = arith.constant dense<0.000000e+00> : vector<16x32xf32>
    %9 = tpu.matmul %3, %8, %cst_10 {dimension_numbers = #tpu.dot_dimension_numbers<[1], [1], [0], [0], [0, 0, 1, 0], [], []>} : vector<16x16xf32>, vector<32x16xf32>, vector<16x32xf32> -> vector<16x32xf32>
    %c0_11 = arith.constant 0 : index
    %c0_12 = arith.constant 0 : index
    %10 = vector.load %arg5[%c0_11, %c0_12] : memref<32x16xf32, #tpu.memory_space<vmem>>, vector<32x16xf32>
    %cst_13 = arith.constant dense<0.000000e+00> : vector<16x32xf32>
    %11 = tpu.matmul %3, %10, %cst_13 {dimension_numbers = #tpu.dot_dimension_numbers<[1], [1], [0], [0], [0, 0, 1, 0], [], []>} : vector<16x16xf32>, vector<32x16xf32>, vector<16x32xf32> -> vector<16x32xf32>
    %12 = vector.shape_cast %7 : vector<16x32xf32> to vector<2x8x32xf32>
    %13 = vector.shape_cast %9 : vector<16x32xf32> to vector<2x8x32xf32>
    %14 = vector.shape_cast %11 : vector<16x32xf32> to vector<2x8x32xf32>
    %15 = vector.extract_strided_slice %12 {offsets = [0, 0, 0], sizes = [2, 8, 8], strides = [1, 1, 1]} : vector<2x8x32xf32> to vector<2x8x8xf32>
    %16 = vector.extract_strided_slice %13 {offsets = [0, 0, 0], sizes = [2, 8, 8], strides = [1, 1, 1]} : vector<2x8x32xf32> to vector<2x8x8xf32>
    %17 = vector.extract_strided_slice %14 {offsets = [0, 0, 0], sizes = [2, 8, 8], strides = [1, 1, 1]} : vector<2x8x32xf32> to vector<2x8x8xf32>
    "tpu.trace_start"() <{level = 10 : i32, message = "bqd,bkd->bqk"}> : () -> ()
    %cst_14 = arith.constant dense<0.000000e+00> : vector<2x8x8xf32>
    %18 = tpu.matmul %15, %16, %cst_14 {dimension_numbers = #tpu.dot_dimension_numbers<[2], [2], [1], [1], [0, 0, 0, 1, 1, 1], [0], [0]>} : vector<2x8x8xf32>, vector<2x8x8xf32>, vector<2x8x8xf32> -> vector<2x8x8xf32>
    "tpu.trace_stop"() : () -> ()
    %cst_15 = arith.constant dense<0xFF800000> : vector<2x8xf32>
    %19 = vector.multi_reduction <maximumf>, %18, %cst_15 [2] : vector<2x8x8xf32> to vector<2x8xf32>
    %20 = vector.shape_cast %19 : vector<2x8xf32> to vector<2x8x1xf32>
    %21 = vector.broadcast %20 : vector<2x8x1xf32> to vector<2x8x8xf32>
    %22 = arith.subf %18, %21 : vector<2x8x8xf32>
    %23 = math.exp %22 : vector<2x8x8xf32>
    %cst_16 = arith.constant dense<0.000000e+00> : vector<2x8xf32>
    %24 = vector.multi_reduction <add>, %23, %cst_16 [2] : vector<2x8x8xf32> to vector<2x8xf32>
    %25 = vector.shape_cast %24 : vector<2x8xf32> to vector<2x8x1xf32>
    %26 = vector.broadcast %25 : vector<2x8x1xf32> to vector<2x8x8xf32>
    %27 = arith.divf %23, %26 : vector<2x8x8xf32>
    "tpu.trace_start"() <{level = 10 : i32, message = "bqk,bkd->bqd"}> : () -> ()
    %cst_17 = arith.constant dense<0.000000e+00> : vector<2x8x8xf32>
    %28 = tpu.matmul %27, %17, %cst_17 {dimension_numbers = #tpu.dot_dimension_numbers<[2], [1], [1], [2], [0, 0, 0, 1, 1, 2], [0], [0]>} : vector<2x8x8xf32>, vector<2x8x8xf32>, vector<2x8x8xf32> -> vector<2x8x8xf32>
    "tpu.trace_stop"() : () -> ()
    %29 = vector.extract_strided_slice %12 {offsets = [0, 0, 8], sizes = [2, 8, 8], strides = [1, 1, 1]} : vector<2x8x32xf32> to vector<2x8x8xf32>
    %30 = vector.extract_strided_slice %13 {offsets = [0, 0, 8], sizes = [2, 8, 8], strides = [1, 1, 1]} : vector<2x8x32xf32> to vector<2x8x8xf32>
    %31 = vector.extract_strided_slice %14 {offsets = [0, 0, 8], sizes = [2, 8, 8], strides = [1, 1, 1]} : vector<2x8x32xf32> to vector<2x8x8xf32>
    "tpu.trace_start"() <{level = 10 : i32, message = "bqd,bkd->bqk"}> : () -> ()
    %cst_18 = arith.constant dense<0.000000e+00> : vector<2x8x8xf32>
    %32 = tpu.matmul %29, %30, %cst_18 {dimension_numbers = #tpu.dot_dimension_numbers<[2], [2], [1], [1], [0, 0, 0, 1, 1, 1], [0], [0]>} : vector<2x8x8xf32>, vector<2x8x8xf32>, vector<2x8x8xf32> -> vector<2x8x8xf32>
    "tpu.trace_stop"() : () -> ()
    %cst_19 = arith.constant dense<0xFF800000> : vector<2x8xf32>
    %33 = vector.multi_reduction <maximumf>, %32, %cst_19 [2] : vector<2x8x8xf32> to vector<2x8xf32>
    %34 = vector.shape_cast %33 : vector<2x8xf32> to vector<2x8x1xf32>
    %35 = vector.broadcast %34 : vector<2x8x1xf32> to vector<2x8x8xf32>
    %36 = arith.subf %32, %35 : vector<2x8x8xf32>
    %37 = math.exp %36 : vector<2x8x8xf32>
    %cst_20 = arith.constant dense<0.000000e+00> : vector<2x8xf32>
    %38 = vector.multi_reduction <add>, %37, %cst_20 [2] : vector<2x8x8xf32> to vector<2x8xf32>
    %39 = vector.shape_cast %38 : vector<2x8xf32> to vector<2x8x1xf32>
    %40 = vector.broadcast %39 : vector<2x8x1xf32> to vector<2x8x8xf32>
    %41 = arith.divf %37, %40 : vector<2x8x8xf32>
    "tpu.trace_start"() <{level = 10 : i32, message = "bqk,bkd->bqd"}> : () -> ()
    %cst_21 = arith.constant dense<0.000000e+00> : vector<2x8x8xf32>
    %42 = tpu.matmul %41, %31, %cst_21 {dimension_numbers = #tpu.dot_dimension_numbers<[2], [1], [1], [2], [0, 0, 0, 1, 1, 2], [0], [0]>} : vector<2x8x8xf32>, vector<2x8x8xf32>, vector<2x8x8xf32> -> vector<2x8x8xf32>
    "tpu.trace_stop"() : () -> ()
    %43 = vector.extract_strided_slice %12 {offsets = [0, 0, 16], sizes = [2, 8, 8], strides = [1, 1, 1]} : vector<2x8x32xf32> to vector<2x8x8xf32>
    %44 = vector.extract_strided_slice %13 {offsets = [0, 0, 16], sizes = [2, 8, 8], strides = [1, 1, 1]} : vector<2x8x32xf32> to vector<2x8x8xf32>
    %45 = vector.extract_strided_slice %14 {offsets = [0, 0, 16], sizes = [2, 8, 8], strides = [1, 1, 1]} : vector<2x8x32xf32> to vector<2x8x8xf32>
    "tpu.trace_start"() <{level = 10 : i32, message = "bqd,bkd->bqk"}> : () -> ()
    %cst_22 = arith.constant dense<0.000000e+00> : vector<2x8x8xf32>
    %46 = tpu.matmul %43, %44, %cst_22 {dimension_numbers = #tpu.dot_dimension_numbers<[2], [2], [1], [1], [0, 0, 0, 1, 1, 1], [0], [0]>} : vector<2x8x8xf32>, vector<2x8x8xf32>, vector<2x8x8xf32> -> vector<2x8x8xf32>
    "tpu.trace_stop"() : () -> ()
    %cst_23 = arith.constant dense<0xFF800000> : vector<2x8xf32>
    %47 = vector.multi_reduction <maximumf>, %46, %cst_23 [2] : vector<2x8x8xf32> to vector<2x8xf32>
    %48 = vector.shape_cast %47 : vector<2x8xf32> to vector<2x8x1xf32>
    %49 = vector.broadcast %48 : vector<2x8x1xf32> to vector<2x8x8xf32>
    %50 = arith.subf %46, %49 : vector<2x8x8xf32>
    %51 = math.exp %50 : vector<2x8x8xf32>
    %cst_24 = arith.constant dense<0.000000e+00> : vector<2x8xf32>
    %52 = vector.multi_reduction <add>, %51, %cst_24 [2] : vector<2x8x8xf32> to vector<2x8xf32>
    %53 = vector.shape_cast %52 : vector<2x8xf32> to vector<2x8x1xf32>
    %54 = vector.broadcast %53 : vector<2x8x1xf32> to vector<2x8x8xf32>
    %55 = arith.divf %51, %54 : vector<2x8x8xf32>
    "tpu.trace_start"() <{level = 10 : i32, message = "bqk,bkd->bqd"}> : () -> ()
    %cst_25 = arith.constant dense<0.000000e+00> : vector<2x8x8xf32>
    %56 = tpu.matmul %55, %45, %cst_25 {dimension_numbers = #tpu.dot_dimension_numbers<[2], [1], [1], [2], [0, 0, 0, 1, 1, 2], [0], [0]>} : vector<2x8x8xf32>, vector<2x8x8xf32>, vector<2x8x8xf32> -> vector<2x8x8xf32>
    "tpu.trace_stop"() : () -> ()
    %57 = vector.extract_strided_slice %12 {offsets = [0, 0, 24], sizes = [2, 8, 8], strides = [1, 1, 1]} : vector<2x8x32xf32> to vector<2x8x8xf32>
    %58 = vector.extract_strided_slice %13 {offsets = [0, 0, 24], sizes = [2, 8, 8], strides = [1, 1, 1]} : vector<2x8x32xf32> to vector<2x8x8xf32>
    %59 = vector.extract_strided_slice %14 {offsets = [0, 0, 24], sizes = [2, 8, 8], strides = [1, 1, 1]} : vector<2x8x32xf32> to vector<2x8x8xf32>
    "tpu.trace_start"() <{level = 10 : i32, message = "bqd,bkd->bqk"}> : () -> ()
    %cst_26 = arith.constant dense<0.000000e+00> : vector<2x8x8xf32>
    %60 = tpu.matmul %57, %58, %cst_26 {dimension_numbers = #tpu.dot_dimension_numbers<[2], [2], [1], [1], [0, 0, 0, 1, 1, 1], [0], [0]>} : vector<2x8x8xf32>, vector<2x8x8xf32>, vector<2x8x8xf32> -> vector<2x8x8xf32>
    "tpu.trace_stop"() : () -> ()
    %cst_27 = arith.constant dense<0xFF800000> : vector<2x8xf32>
    %61 = vector.multi_reduction <maximumf>, %60, %cst_27 [2] : vector<2x8x8xf32> to vector<2x8xf32>
    %62 = vector.shape_cast %61 : vector<2x8xf32> to vector<2x8x1xf32>
    %63 = vector.broadcast %62 : vector<2x8x1xf32> to vector<2x8x8xf32>
    %64 = arith.subf %60, %63 : vector<2x8x8xf32>
    %65 = math.exp %64 : vector<2x8x8xf32>
    %cst_28 = arith.constant dense<0.000000e+00> : vector<2x8xf32>
    %66 = vector.multi_reduction <add>, %65, %cst_28 [2] : vector<2x8x8xf32> to vector<2x8xf32>
    %67 = vector.shape_cast %66 : vector<2x8xf32> to vector<2x8x1xf32>
    %68 = vector.broadcast %67 : vector<2x8x1xf32> to vector<2x8x8xf32>
    %69 = arith.divf %65, %68 : vector<2x8x8xf32>
    "tpu.trace_start"() <{level = 10 : i32, message = "bqk,bkd->bqd"}> : () -> ()
    %cst_29 = arith.constant dense<0.000000e+00> : vector<2x8x8xf32>
    %70 = tpu.matmul %69, %59, %cst_29 {dimension_numbers = #tpu.dot_dimension_numbers<[2], [1], [1], [2], [0, 0, 0, 1, 1, 2], [0], [0]>} : vector<2x8x8xf32>, vector<2x8x8xf32>, vector<2x8x8xf32> -> vector<2x8x8xf32>
    "tpu.trace_stop"() : () -> ()
    %71 = tpu.concatenate %28, %42, %56, %70 in 2 : vector<2x8x8xf32>, vector<2x8x8xf32>, vector<2x8x8xf32>, vector<2x8x8xf32> -> vector<2x8x32xf32>
    %72 = vector.shape_cast %71 : vector<2x8x32xf32> to vector<2x256xf32>
    %c0_30 = arith.constant 0 : index
    %c0_31 = arith.constant 0 : index
    %c0_32 = arith.constant 0 : index
    %73 = vector.load %arg6[%c0_30, %c0_31, %c0_32] : memref<1x2x256xf32, #tpu.memory_space<vmem>>, vector<1x2x256xf32>
    %74 = vector.shape_cast %73 : vector<1x2x256xf32> to vector<2x256xf32>
    %75 = vector.shape_cast %72 : vector<2x256xf32> to vector<1x2x256xf32>
    tpu.vector_store %arg6[%c0_30, %c0_31, %c0_32], %75 {strides = array<i32>} : memref<1x2x256xf32, #tpu.memory_space<vmem>>, vector<1x2x256xf32>,
    return
  }
  func.func @transform_0(%arg0: i32) -> (i32, i32, i32) {
    %c0_i32 = arith.constant 0 : i32
    %c0_i32_0 = arith.constant 0 : i32
    %c0_i32_1 = arith.constant 0 : i32
    return %arg0, %c0_i32, %c0_i32_0 : i32, i32, i32
  }
  func.func @transform_1(%arg0: i32) -> (i32, i32, i32) {
    %c0_i32 = arith.constant 0 : i32
    %c0_i32_0 = arith.constant 0 : i32
    %c0_i32_1 = arith.constant 0 : i32
    return %arg0, %c0_i32, %c0_i32_0 : i32, i32, i32
  }
  func.func @transform_2(%arg0: i32) -> (i32, i32) {
    %c0_i32 = arith.constant 0 : i32
    %c0_i32_0 = arith.constant 0 : i32
    %c0_i32_1 = arith.constant 0 : i32
    return %c0_i32, %c0_i32_0 : i32, i32
  }
  func.func @transform_3(%arg0: i32) -> (i32, i32) {
    %c0_i32 = arith.constant 0 : i32
    %c0_i32_0 = arith.constant 0 : i32
    %c0_i32_1 = arith.constant 0 : i32
    return %c0_i32, %c0_i32_0 : i32, i32
  }
  func.func @transform_4(%arg0: i32) -> (i32, i32) {
    %c0_i32 = arith.constant 0 : i32
    %c0_i32_0 = arith.constant 0 : i32
    %c0_i32_1 = arith.constant 0 : i32
    return %c0_i32, %c0_i32_0 : i32, i32
  }
  func.func @transform_5(%arg0: i32) -> (i32, i32, i32) {
    %c0_i32 = arith.constant 0 : i32
    %c0_i32_0 = arith.constant 0 : i32
    %c0_i32_1 = arith.constant 0 : i32
    return %arg0, %c0_i32, %c0_i32_0 : i32, i32, i32
  }
}

</mosaic_0001>

<llo_original>
// kernel: tpu_custom_call.1
$region0: #{tpu_custom_call.1}
  #allocation0 [shape = 'u32[]', space=smem, size = 0x4, offset = 0x4, fixed_abs, tag = 'smem constant byte address 0x4 - core index']
  #allocation1 [shape = 'u32[144,128]{1,0:T(1,128)}', space=vmem, size = 0x12000, scoped, tag = 'internal scratch']
  %s0 = inlined_call_operand.vmem [shape: f32[4,8,16], index: 0, kind: input, shape index: {}]
  %s1 = inlined_call_operand.vmem [shape: f32[4,8,16], index: 1, kind: input, shape index: {}]
  %s2 = inlined_call_operand.vmem [shape: f32[32,16], index: 2, kind: input, shape index: {}]
  %s3 = inlined_call_operand.vmem [shape: f32[32,16], index: 3, kind: input, shape index: {}]
  %s4 = inlined_call_operand.vmem [shape: f32[32,16], index: 4, kind: input, shape index: {}]
  %s5 = inlined_call_operand.hbm [shape: f32[2,2,256], index: 5, kind: output, shape index: {}]
  %s6 = sld [smem:[#allocation0]]
  $region53: #{tpu_custom_call.1} parent=0
    _
  %s8 = ssub.s32 1, %s6
  %s9 = scalar_select 0, %s8, %s6
  $region1: #{tpu_custom_call.1} parent=0
    #allocation2 [shape = 'u8[4096]{0}', space=vmem, size = 0x1000, scoped, tag = 'output window, operand 0']
    #allocation3 [shape = 's32[2]{0}', space=sflag, size = 0x8, scoped, tag = 'scoped memory for tpu_custom_call.1']
    %10 = vsyncpa [#allocation3], 0
    %s11 = scalar_lea.sflag [#allocation3], 1
    %12 = vsyncpa %s11, 0
    loop: start=0, step=1, limit=4
    $region2: #{tpu_custom_call.1} parent=1 // loop_pre_header
      _
    $region3: #{tpu_custom_call.1} parent=1 // loop_header
      %s14 = sphi 0, %s18
      %p15 = scmp.ge.s32.totalorder %s14, 4
      %s24 = sphi 0, %s26
      %s27 = sphi 0, %s24
      %s28 = sphi 0, %s27
      %s44 = sphi 0, %s28
      %s50 = sphi 0, %s52
      %s53 = sphi 0, %s50
      %s54 = sphi 0, %s53
      %s70 = sphi 0, %s54
      %s74 = sphi 0, %s74
      %s76 = sphi 0, %s74
      %s77 = sphi 0, %s76
      %s91 = sphi 0, %s77
      %s95 = sphi 0, %s95
      %s97 = sphi 0, %s95
      %s98 = sphi 0, %s97
      %s112 = sphi 0, %s98
      %s116 = sphi 0, %s116
      %s118 = sphi 0, %s116
      %s119 = sphi 0, %s118
      %s133 = sphi 0, %s119
      %s139 = sphi 0, %s141
      %s142 = sphi 0, %s139
      %s143 = sphi 0, %s142
      %s159 = sphi 0, %s143
    $region4: #{tpu_custom_call.1} parent=1 // loop_header_branch
      %17 = sbr.rel (%p15) target = $region8
    $region5: #{tpu_custom_call.1} parent=1 // loop_body
      %s19 = ssub.s32 %s14, 1
      %s20 = ssub.s32 %s14, 2
      %s21 = sadd.s32 %s14, 1
      %s22 = ssub.s32 %s14, %s21
      %p23 = scmp.eq.s32.totalorder %s22, 0
      %s25 = sadd.s32 %s24, 1
      %s26 = scalar_select %p23, %s24, %s25
      %p29 = pneg %p23
      %p30 = scmp.eq.s32.totalorder %s14, 1
      %p31 = por %p29, %p30
      %p32 = scmp.ne.s32.totalorder %s24, %s27
      %p33 = scmp.eq.s32.totalorder %s14, 0
      %p34 = por %p32, %p33
      %p35 = scmp.ne.s32.totalorder %s24, %s27
      %p36 = scmp.eq.s32.totalorder %s19, 1
      %p37 = por %p35, %p36
      %p38 = scmp.ne.s32.totalorder %s27, %s28
      %p39 = scmp.eq.s32.totalorder %s19, 0
      %p40 = por %p38, %p39
      %p41 = scmp.ne.s32.totalorder %s27, %s28
      %p42 = scmp.eq.s32.totalorder %s20, 1
      %p43 = por %p41, %p42
      %p45 = scmp.ne.s32.totalorder %s28, %s44
      %p46 = scmp.eq.s32.totalorder %s20, 0
      %p47 = por %p45, %p46
      %s48 = ssub.s32 %s14, %s21
      %p49 = scmp.eq.s32.totalorder %s48, 0
      %s51 = sadd.s32 %s50, 1
      %s52 = scalar_select %p49, %s50, %s51
      %p55 = pneg %p49
      %p56 = scmp.eq.s32.totalorder %s14, 1
      %p57 = por %p55, %p56
      %p58 = scmp.ne.s32.totalorder %s50, %s53
      %p59 = scmp.eq.s32.totalorder %s14, 0
      %p60 = por %p58, %p59
      %p61 = scmp.ne.s32.totalorder %s50, %s53
      %p62 = scmp.eq.s32.totalorder %s19, 1
      %p63 = por %p61, %p62
      %p64 = scmp.ne.s32.totalorder %s53, %s54
      %p65 = scmp.eq.s32.totalorder %s19, 0
      %p66 = por %p64, %p65
      %p67 = scmp.ne.s32.totalorder %s53, %s54
      %p68 = scmp.eq.s32.totalorder %s20, 1
      %p69 = por %p67, %p68
      %p71 = scmp.ne.s32.totalorder %s54, %s70
      %p72 = scmp.eq.s32.totalorder %s20, 0
      %p73 = por %p71, %p72
      %s75 = sadd.s32 %s74, 1
      %p78 = scmp.eq.s32.totalorder %s14, 1
      %p79 = scmp.ne.s32.totalorder %s74, %s76
      %p80 = scmp.eq.s32.totalorder %s14, 0
      %p81 = por %p79, %p80
      %p82 = scmp.ne.s32.totalorder %s74, %s76
      %p83 = scmp.eq.s32.totalorder %s19, 1
      %p84 = por %p82, %p83
      %p85 = scmp.ne.s32.totalorder %s76, %s77
      %p86 = scmp.eq.s32.totalorder %s19, 0
      %p87 = por %p85, %p86
      %p88 = scmp.ne.s32.totalorder %s76, %s77
      %p89 = scmp.eq.s32.totalorder %s20, 1
      %p90 = por %p88, %p89
      %p92 = scmp.ne.s32.totalorder %s77, %s91
      %p93 = scmp.eq.s32.totalorder %s20, 0
      %p94 = por %p92, %p93
      %s96 = sadd.s32 %s95, 1
      %p99 = scmp.eq.s32.totalorder %s14, 1
      %p100 = scmp.ne.s32.totalorder %s95, %s97
      %p101 = scmp.eq.s32.totalorder %s14, 0
      %p102 = por %p100, %p101
      %p103 = scmp.ne.s32.totalorder %s95, %s97
      %p104 = scmp.eq.s32.totalorder %s19, 1
      %p105 = por %p103, %p104
      %p106 = scmp.ne.s32.totalorder %s97, %s98
      %p107 = scmp.eq.s32.totalorder %s19, 0
      %p108 = por %p106, %p107
      %p109 = scmp.ne.s32.totalorder %s97, %s98
      %p110 = scmp.eq.s32.totalorder %s20, 1
      %p111 = por %p109, %p110
      %p113 = scmp.ne.s32.totalorder %s98, %s112
      %p114 = scmp.eq.s32.totalorder %s20, 0
      %p115 = por %p113, %p114
      %s117 = sadd.s32 %s116, 1
      %p120 = scmp.eq.s32.totalorder %s14, 1
      %p121 = scmp.ne.s32.totalorder %s116, %s118
      %p122 = scmp.eq.s32.totalorder %s14, 0
      %p123 = por %p121, %p122
      %p124 = scmp.ne.s32.totalorder %s116, %s118
      %p125 = scmp.eq.s32.totalorder %s19, 1
      %p126 = por %p124, %p125
      %p127 = scmp.ne.s32.totalorder %s118, %s119
      %p128 = scmp.eq.s32.totalorder %s19, 0
      %p129 = por %p127, %p128
      %p130 = scmp.ne.s32.totalorder %s118, %s119
      %p131 = scmp.eq.s32.totalorder %s20, 1
      %p132 = por %p130, %p131
      %p134 = scmp.ne.s32.totalorder %s119, %s133
      %p135 = scmp.eq.s32.totalorder %s20, 0
      %p136 = por %p134, %p135
      %s137 = ssub.s32 %s14, %s21
      %p138 = scmp.eq.s32.totalorder %s137, 0
      %s140 = sadd.s32 %s139, 1
      %s141 = scalar_select %p138, %s139, %s140
      %p144 = pneg %p138
      %p145 = scmp.eq.s32.totalorder %s14, 1
      %p146 = por %p144, %p145
      %p147 = scmp.ne.s32.totalorder %s139, %s142
      %p148 = scmp.eq.s32.totalorder %s14, 0
      %p149 = por %p147, %p148
      %p150 = scmp.ne.s32.totalorder %s139, %s142
      %p151 = scmp.eq.s32.totalorder %s19, 1
      %p152 = por %p150, %p151
      %p153 = scmp.ne.s32.totalorder %s142, %s143
      %p154 = scmp.eq.s32.totalorder %s19, 0
      %p155 = por %p153, %p154
      %p156 = scmp.ne.s32.totalorder %s142, %s143
      %p157 = scmp.eq.s32.totalorder %s20, 1
      %p158 = por %p156, %p157
      %p160 = scmp.ne.s32.totalorder %s143, %s159
      %p161 = scmp.eq.s32.totalorder %s20, 0
      %p162 = por %p160, %p161
      %p163 = scmp.le.s32.totalorder 1, %s14
      %p164 = scmp.lt.s32.totalorder %s14, 3
      %p165 = pnand %p163, %p164
      %p166 = pneg %p165
      // Predicated region
      $region9: #{tpu_custom_call.1} parent=5 // pred_check
        _
      $region10: #{tpu_custom_call.1} parent=5 // pred_check_branch
        %168 = sbr.rel (%p165) target = $region12
      $region11: #{tpu_custom_call.1} parent=5 // pred_region
        %s169 = ssub.s32 %s14, 1
        // Predicated region
        $region13: #{tpu_custom_call.1} parent=11 // pred_check
          %p170 = pneg %p87
        $region14: #{tpu_custom_call.1} parent=11 // pred_check_branch
          %172 = sbr.rel (%p170) target = $region16
        $region15: #{tpu_custom_call.1} parent=11 // pred_region
          _
        $region16: #{tpu_custom_call.1} parent=11 // pred_fallthru
          _
        // Predicated region
        $region17: #{tpu_custom_call.1} parent=11 // pred_check
          %p173 = pneg %p108
        $region18: #{tpu_custom_call.1} parent=11 // pred_check_branch
          %175 = sbr.rel (%p173) target = $region20
        $region19: #{tpu_custom_call.1} parent=11 // pred_region
          _
        $region20: #{tpu_custom_call.1} parent=11 // pred_fallthru
          _
        // Predicated region
        $region21: #{tpu_custom_call.1} parent=11 // pred_check
          %p176 = pneg %p129
        $region22: #{tpu_custom_call.1} parent=11 // pred_check_branch
          %178 = sbr.rel (%p176) target = $region24
        $region23: #{tpu_custom_call.1} parent=11 // pred_region
          _
        $region24: #{tpu_custom_call.1} parent=11 // pred_fallthru
          _
      $region12: #{tpu_custom_call.1} parent=5 // pred_fallthru
        _
      %p179 = scmp.lt.s32.totalorder %s14, 2
      // Predicated region
      $region25: #{tpu_custom_call.1} parent=5 // pred_check
        %p180 = pneg %p179
      $region26: #{tpu_custom_call.1} parent=5 // pred_check_branch
        %182 = sbr.rel (%p180) target = $region28
      $region27: #{tpu_custom_call.1} parent=5 // pred_region
        // Predicated region
        $region29: #{tpu_custom_call.1} parent=27 // pred_check
          %p183 = pneg %p34
        $region30: #{tpu_custom_call.1} parent=27 // pred_check_branch
          %185 = sbr.rel (%p183) target = $region32
        $region31: #{tpu_custom_call.1} parent=27 // pred_region
          %s186 = smul.u32 2, %s14
          %p187 = scmp.lt.s32.totalorder %s186, 3
          %s188 = scalar_select %p187, %s186, 3
          %s189 = smul.addr %s188, 8
          %s190 = scalar_lea.vmem %s0, %s189
          %s191 = smul.u32 2, %s14
        $region32: #{tpu_custom_call.1} parent=27 // pred_fallthru
          _
        // Predicated region
        $region33: #{tpu_custom_call.1} parent=27 // pred_check
          %p192 = pneg %p60
        $region34: #{tpu_custom_call.1} parent=27 // pred_check_branch
          %194 = sbr.rel (%p192) target = $region36
        $region35: #{tpu_custom_call.1} parent=27 // pred_region
          %s195 = smul.u32 2, %s14
          %p196 = scmp.lt.s32.totalorder %s195, 3
          %s197 = scalar_select %p196, %s195, 3
          %s198 = smul.addr %s197, 8
          %s199 = scalar_lea.vmem %s1, %s198
          %s200 = smul.u32 2, %s14
        $region36: #{tpu_custom_call.1} parent=27 // pred_fallthru
          _
      $region28: #{tpu_custom_call.1} parent=5 // pred_fallthru
        _
      %p201 = scmp.le.s32.totalorder 1, %s14
      %p202 = scmp.lt.s32.totalorder %s14, 3
      %p203 = pnand %p201, %p202
      %p204 = pneg %p203
      // Predicated region
      $region37: #{tpu_custom_call.1} parent=5 // pred_check
        _
      $region38: #{tpu_custom_call.1} parent=5 // pred_check_branch
        %206 = sbr.rel (%p203) target = $region40
      $region39: #{tpu_custom_call.1} parent=5 // pred_region
        %s207 = ssub.s32 %s14, 1
        %s208 = smul.u32 2, %s19
        %p209 = scmp.lt.s32.totalorder %s208, 3
        %s210 = scalar_select %p209, %s208, 3
        %s211 = smul.addr %s210, 8
        %s212 = scalar_lea.vmem %s0, %s211
        %p213 = pneg %p40
        %p214 = pneg %p37
        %s215 = smul.u32 2, %s19
        %p216 = scmp.lt.s32.totalorder %s215, 3
        %s217 = scalar_select %p216, %s215, 3
        %s218 = smul.addr %s217, 8
        %s219 = scalar_lea.vmem %s1, %s218
        %p220 = pneg %p66
        %p221 = pneg %p63
        %p222 = pneg %p87
        %p223 = pneg %p84
        %p224 = pneg %p108
        %p225 = pneg %p105
        %p226 = pneg %p129
        %p227 = pneg %p126
        %p228 = pneg %p155
        %p229 = pneg %p152
        %s230 = sand.u32 %s142, 1
        %s231 = scalar_lea.sflag [#allocation3], %s230
        %s232 = sand.u32 %s142, 1
        %s233 = smul.addr %s232, 4
        %s234 = scalar_lea.vmem [#allocation2], %s233
        %s235 = smul.u32 2, %s19
        %p236 = scmp.lt.s32.totalorder %s235, 3
        %s237 = scalar_select %p236, %s235, 3
        %s238 = smul.addr %s237, 8
        %s239 = scalar_lea.vmem %s0, %s238
        %s240 = smul.u32 2, %s19
        %s241 = smul.u32 2, %s19
        %p242 = scmp.lt.s32.totalorder %s241, 3
        %s243 = scalar_select %p242, %s241, 3
        %s244 = smul.addr %s243, 8
        %s245 = scalar_lea.vmem %s1, %s244
        %s246 = smul.u32 2, %s19
        %v247 = vld [vmem:[%s239] sm:$0xff]
        %v248 = vld [vmem:[%s239 + $0x8] sm:$0xff]
        %v249 = vld [vmem:[%s245] sm:$0xff]
        %v250 = vld [vmem:[%s245 + $0x8] sm:$0xff]
        %v251 = vld [vmem:[%s2] sm:$0xff]
        %v252 = vld [vmem:[%s2 + $0x8] sm:$0xff]
        %v253 = vld [vmem:[%s2 + $0x10] sm:$0xff]
        %v254 = vld [vmem:[%s2 + $0x18] sm:$0xff]
        %vm255 = vcmask 130048
        %v257 = vsel %vm255, %v247, 0
        %v260 = vsel %vm255, %v248, 0
        %v263 = vsel %vm255, %v251, 0
        %v266 = vsel %vm255, %v252, 0
        %v269 = vsel %vm255, %v253, 0
        %v272 = vsel %vm255, %v254, 0
        %274 = vmatprep.subr.mxu0 0.0
        %275 = vmatpush1.xpose.msra.mxu0 %v263
        %276 = vmatprep.subr.mxu0 0.0
        %277 = vmatpush1.xpose.msra.mxu0 %v266
        %278 = vmatprep.subr.mxu0 0.0
        %279 = vmatpush1.xpose.msra.mxu0 %v269
        %280 = vmatprep.subr.mxu0 0.0
        %281 = vmatpush1.xpose.msra.mxu0 %v272
        %282 = vmatprep.subr.mxu0 0.0
        %283 = vmatpush1.xpose.msra.mxu0 0.0
        %284 = vmatprep.subr.mxu0 0.0
        %285 = vmatpush1.xpose.msra.mxu0 0.0
        %286 = vmatprep.subr.mxu0 0.0
        %287 = vmatpush1.xpose.msra.mxu0 0.0
        %288 = vmatprep.subr.mxu0 0.0
        %289 = vmatpush1.xpose.msra.mxu0 0.0
        %290 = vmatprep.subr.mxu0 0.0
        %291 = vmatpush1.xpose.msra.mxu0 0.0
        %292 = vmatprep.subr.mxu0 0.0
        %293 = vmatpush1.xpose.msra.mxu0 0.0
        %294 = vmatprep.subr.mxu0 0.0
        %295 = vmatpush1.xpose.msra.mxu0 0.0
        %296 = vmatprep.subr.mxu0 0.0
        %297 = vmatpush1.xpose.msra.mxu0 0.0
        %298 = vmatprep.subr.mxu0 0.0
        %299 = vmatpush1.xpose.msra.mxu0 0.0
        %300 = vmatprep.subr.mxu0 0.0
        %301 = vmatpush1.xpose.msra.mxu0 0.0
        %302 = vmatprep.subr.mxu0 0.0
        %303 = vmatpush1.xpose.msra.mxu0 0.0
        %304 = vmatprep.subr.mxu0 0.0
        %305 = vmatpush1.xpose.msra.mxu0 0.0
        %306 = vmatprep.subr.mxu0 0.0
        %307 = vmatpush1.xpose.msra.mxu0 0.0
        %308 = vmatprep.subr.mxu0 0.0
        %309 = vmatpush1.xpose.msra.mxu0 0.0
        %310 = vmatprep.subr.mxu0 0.0
        %311 = vmatpush1.xpose.msra.mxu0 0.0
        %312 = vmatprep.subr.mxu0 0.0
        %313 = vmatpush1.xpose.msra.mxu0 0.0
        %314 = vmatprep.subr.mxu0 0.0
        %315 = vmatpush1.xpose.msra.mxu0 0.0
        %316 = vmatprep.subr.mxu0 0.0
        %317 = vmatpush1.xpose.msra.mxu0 0.0
        %318 = vmatprep.subr.mxu0 0.0
        %319 = vmatpush1.xpose.msra.mxu0 0.0
        %320 = vmatprep.subr.mxu0 0.0
        %321 = vmatpush1.xpose.msra.mxu0 0.0
        %322 = vmatprep.subr.mxu0 0.0
        %323 = vmatpush1.xpose.msra.mxu0 0.0
        %324 = vmatprep.subr.mxu0 0.0
        %325 = vmatpush1.xpose.msra.mxu0 0.0
        %326 = vmatprep.subr.mxu0 0.0
        %327 = vmatpush1.xpose.msra.mxu0 0.0
        %328 = vmatprep.subr.mxu0 0.0
        %329 = vmatpush1.xpose.msra.mxu0 0.0
        %330 = vmatprep.subr.mxu0 0.0
        %331 = vmatpush1.xpose.msra.mxu0 0.0
        %332 = vmatprep.subr.mxu0 0.0
        %333 = vmatpush1.xpose.msra.mxu0 0.0
        %334 = vmatprep.subr.mxu0 0.0
        %335 = vmatpush1.xpose.msra.mxu0 0.0
        %336 = vmatprep.subr.mxu0 0.0
        %337 = vmatpush1.xpose.msra.mxu0 0.0
        %338 = vmatprep.mubr.f32.mxu0 0.0
        %339 = vmatmul.mubr.f32.gmra.mrb[0].mxu0 %v257
        %v340 = vpop.f32.mrb[0].mxu0
        %v341 = vadd.f32 0.0, %v340
        %v342 = vpop.f32.mrb[0].mxu0
        %343 = vmatprep.mubr.f32.mxu0 0.0
        %344 = vmatmul.mubr.f32.gmra.mrb[0].mxu0 %v260
        %v345 = vpop.f32.mrb[0].mxu0
        %v346 = vadd.f32 0.0, %v345
        %v347 = vpop.f32.mrb[0].mxu0
        %348 = vdwg.mxu0
        %v349 = vmul.f32 %v341, 0.25
        %v350 = vmul.f32 %v346, 0.25
        %v351 = vld [vmem:[%s3] sm:$0xff]
        %v352 = vld [vmem:[%s3 + $0x8] sm:$0xff]
        %v353 = vld [vmem:[%s3 + $0x10] sm:$0xff]
        %v354 = vld [vmem:[%s3 + $0x18] sm:$0xff]
        %v356 = vsel %vm255, %v249, 0
        %v359 = vsel %vm255, %v250, 0
        %v362 = vsel %vm255, %v351, 0
        %v365 = vsel %vm255, %v352, 0
        %v368 = vsel %vm255, %v353, 0
        %v371 = vsel %vm255, %v354, 0
        %373 = vmatprep.subr.mxu0 0.0
        %374 = vmatpush1.xpose.msra.mxu0 %v362
        %375 = vmatprep.subr.mxu0 0.0
        %376 = vmatpush1.xpose.msra.mxu0 %v365
        %377 = vmatprep.subr.mxu0 0.0
        %378 = vmatpush1.xpose.msra.mxu0 %v368
        %379 = vmatprep.subr.mxu0 0.0
        %380 = vmatpush1.xpose.msra.mxu0 %v371
        %381 = vmatprep.subr.mxu0 0.0
        %382 = vmatpush1.xpose.msra.mxu0 0.0
        %383 = vmatprep.subr.mxu0 0.0
        %384 = vmatpush1.xpose.msra.mxu0 0.0
        %385 = vmatprep.subr.mxu0 0.0
        %386 = vmatpush1.xpose.msra.mxu0 0.0
        %387 = vmatprep.subr.mxu0 0.0
        %388 = vmatpush1.xpose.msra.mxu0 0.0
        %389 = vmatprep.subr.mxu0 0.0
        %390 = vmatpush1.xpose.msra.mxu0 0.0
        %391 = vmatprep.subr.mxu0 0.0
        %392 = vmatpush1.xpose.msra.mxu0 0.0
        %393 = vmatprep.subr.mxu0 0.0
        %394 = vmatpush1.xpose.msra.mxu0 0.0
        %395 = vmatprep.subr.mxu0 0.0
        %396 = vmatpush1.xpose.msra.mxu0 0.0
        %397 = vmatprep.subr.mxu0 0.0
        %398 = vmatpush1.xpose.msra.mxu0 0.0
        %399 = vmatprep.subr.mxu0 0.0
        %400 = vmatpush1.xpose.msra.mxu0 0.0
        %401 = vmatprep.subr.mxu0 0.0
        %402 = vmatpush1.xpose.msra.mxu0 0.0
        %403 = vmatprep.subr.mxu0 0.0
        %404 = vmatpush1.xpose.msra.mxu0 0.0
        %405 = vmatprep.subr.mxu0 0.0
        %406 = vmatpush1.xpose.msra.mxu0 0.0
        %407 = vmatprep.subr.mxu0 0.0
        %408 = vmatpush1.xpose.msra.mxu0 0.0
        %409 = vmatprep.subr.mxu0 0.0
        %410 = vmatpush1.xpose.msra.mxu0 0.0
        %411 = vmatprep.subr.mxu0 0.0
        %412 = vmatpush1.xpose.msra.mxu0 0.0
        %413 = vmatprep.subr.mxu0 0.0
        %414 = vmatpush1.xpose.msra.mxu0 0.0
        %415 = vmatprep.subr.mxu0 0.0
        %416 = vmatpush1.xpose.msra.mxu0 0.0
        %417 = vmatprep.subr.mxu0 0.0
        %418 = vmatpush1.xpose.msra.mxu0 0.0
        %419 = vmatprep.subr.mxu0 0.0
        %420 = vmatpush1.xpose.msra.mxu0 0.0
        %421 = vmatprep.subr.mxu0 0.0
        %422 = vmatpush1.xpose.msra.mxu0 0.0
        %423 = vmatprep.subr.mxu0 0.0
        %424 = vmatpush1.xpose.msra.mxu0 0.0
        %425 = vmatprep.subr.mxu0 0.0
        %426 = vmatpush1.xpose.msra.mxu0 0.0
        %427 = vmatprep.subr.mxu0 0.0
        %428 = vmatpush1.xpose.msra.mxu0 0.0
        %429 = vmatprep.subr.mxu0 0.0
        %430 = vmatpush1.xpose.msra.mxu0 0.0
        %431 = vmatprep.subr.mxu0 0.0
        %432 = vmatpush1.xpose.msra.mxu0 0.0
        %433 = vmatprep.subr.mxu0 0.0
        %434 = vmatpush1.xpose.msra.mxu0 0.0
        %435 = vmatprep.subr.mxu0 0.0
        %436 = vmatpush1.xpose.msra.mxu0 0.0
        %437 = vmatprep.mubr.f32.mxu0 0.0
        %438 = vmatmul.mubr.f32.gmra.mrb[0].mxu0 %v356
        %v439 = vpop.f32.mrb[0].mxu0
        %v440 = vadd.f32 0.0, %v439
        %v441 = vpop.f32.mrb[0].mxu0
        %442 = vmatprep.mubr.f32.mxu0 0.0
        %443 = vmatmul.mubr.f32.gmra.mrb[0].mxu0 %v359
        %v444 = vpop.f32.mrb[0].mxu0
        %v445 = vadd.f32 0.0, %v444
        %v446 = vpop.f32.mrb[0].mxu0
        %447 = vdwg.mxu0
        %v448 = vld [vmem:[%s4] sm:$0xff]
        %v449 = vld [vmem:[%s4 + $0x8] sm:$0xff]
        %v450 = vld [vmem:[%s4 + $0x10] sm:$0xff]
        %v451 = vld [vmem:[%s4 + $0x18] sm:$0xff]
        %v453 = vsel %vm255, %v448, 0
        %v456 = vsel %vm255, %v449, 0
        %v459 = vsel %vm255, %v450, 0
        %v462 = vsel %vm255, %v451, 0
        %464 = vmatprep.subr.mxu0 0.0
        %465 = vmatpush1.xpose.msra.mxu0 %v453
        %466 = vmatprep.subr.mxu0 0.0
        %467 = vmatpush1.xpose.msra.mxu0 %v456
        %468 = vmatprep.subr.mxu0 0.0
        %469 = vmatpush1.xpose.msra.mxu0 %v459
        %470 = vmatprep.subr.mxu0 0.0
        %471 = vmatpush1.xpose.msra.mxu0 %v462
        %472 = vmatprep.subr.mxu0 0.0
        %473 = vmatpush1.xpose.msra.mxu0 0.0
        %474 = vmatprep.subr.mxu0 0.0
        %475 = vmatpush1.xpose.msra.mxu0 0.0
        %476 = vmatprep.subr.mxu0 0.0
        %477 = vmatpush1.xpose.msra.mxu0 0.0
        %478 = vmatprep.subr.mxu0 0.0
        %479 = vmatpush1.xpose.msra.mxu0 0.0
        %480 = vmatprep.subr.mxu0 0.0
        %481 = vmatpush1.xpose.msra.mxu0 0.0
        %482 = vmatprep.subr.mxu0 0.0
        %483 = vmatpush1.xpose.msra.mxu0 0.0
        %484 = vmatprep.subr.mxu0 0.0
        %485 = vmatpush1.xpose.msra.mxu0 0.0
        %486 = vmatprep.subr.mxu0 0.0
        %487 = vmatpush1.xpose.msra.mxu0 0.0
        %488 = vmatprep.subr.mxu0 0.0
        %489 = vmatpush1.xpose.msra.mxu0 0.0
        %490 = vmatprep.subr.mxu0 0.0
        %491 = vmatpush1.xpose.msra.mxu0 0.0
        %492 = vmatprep.subr.mxu0 0.0
        %493 = vmatpush1.xpose.msra.mxu0 0.0
        %494 = vmatprep.subr.mxu0 0.0
        %495 = vmatpush1.xpose.msra.mxu0 0.0
        %496 = vmatprep.subr.mxu0 0.0
        %497 = vmatpush1.xpose.msra.mxu0 0.0
        %498 = vmatprep.subr.mxu0 0.0
        %499 = vmatpush1.xpose.msra.mxu0 0.0
        %500 = vmatprep.subr.mxu0 0.0
        %501 = vmatpush1.xpose.msra.mxu0 0.0
        %502 = vmatprep.subr.mxu0 0.0
        %503 = vmatpush1.xpose.msra.mxu0 0.0
        %504 = vmatprep.subr.mxu0 0.0
        %505 = vmatpush1.xpose.msra.mxu0 0.0
        %506 = vmatprep.subr.mxu0 0.0
        %507 = vmatpush1.xpose.msra.mxu0 0.0
        %508 = vmatprep.subr.mxu0 0.0
        %509 = vmatpush1.xpose.msra.mxu0 0.0
        %510 = vmatprep.subr.mxu0 0.0
        %511 = vmatpush1.xpose.msra.mxu0 0.0
        %512 = vmatprep.subr.mxu0 0.0
        %513 = vmatpush1.xpose.msra.mxu0 0.0
        %514 = vmatprep.subr.mxu0 0.0
        %515 = vmatpush1.xpose.msra.mxu0 0.0
        %516 = vmatprep.subr.mxu0 0.0
        %517 = vmatpush1.xpose.msra.mxu0 0.0
        %518 = vmatprep.subr.mxu0 0.0
        %519 = vmatpush1.xpose.msra.mxu0 0.0
        %520 = vmatprep.subr.mxu0 0.0
        %521 = vmatpush1.xpose.msra.mxu0 0.0
        %522 = vmatprep.subr.mxu0 0.0
        %523 = vmatpush1.xpose.msra.mxu0 0.0
        %524 = vmatprep.subr.mxu0 0.0
        %525 = vmatpush1.xpose.msra.mxu0 0.0
        %526 = vmatprep.subr.mxu0 0.0
        %527 = vmatpush1.xpose.msra.mxu0 0.0
        %528 = vmatprep.mubr.f32.mxu0 0.0
        %529 = vmatmul.mubr.f32.gmra.mrb[0].mxu0 %v356
        %v530 = vpop.f32.mrb[0].mxu0
        %v531 = vadd.f32 0.0, %v530
        %v532 = vpop.f32.mrb[0].mxu0
        %533 = vmatprep.mubr.f32.mxu0 0.0
        %534 = vmatmul.mubr.f32.gmra.mrb[0].mxu0 %v359
        %v535 = vpop.f32.mrb[0].mxu0
        %v536 = vadd.f32 0.0, %v535
        %v537 = vpop.f32.mrb[0].mxu0
        %538 = vdwg.mxu0
        %vm539 = vcmask 64512
        %v541 = vsel %vm539, %v349, 0
        %v544 = vsel %vm539, %v440, 0
        %546 = vmatprep.subr.mxu0 0.0
        %547 = vmatpush1.xpose.msra.mxu0 %v544
        %548 = vmatprep.subr.mxu0 0.0
        %549 = vmatpush1.xpose.msra.mxu0 0.0
        %550 = vmatprep.subr.mxu0 0.0
        %551 = vmatpush1.xpose.msra.mxu0 0.0
        %552 = vmatprep.subr.mxu0 0.0
        %553 = vmatpush1.xpose.msra.mxu0 0.0
        %554 = vmatprep.subr.mxu0 0.0
        %555 = vmatpush1.xpose.msra.mxu0 0.0
        %556 = vmatprep.subr.mxu0 0.0
        %557 = vmatpush1.xpose.msra.mxu0 0.0
        %558 = vmatprep.subr.mxu0 0.0
        %559 = vmatpush1.xpose.msra.mxu0 0.0
        %560 = vmatprep.subr.mxu0 0.0
        %561 = vmatpush1.xpose.msra.mxu0 0.0
        %562 = vmatprep.subr.mxu0 0.0
        %563 = vmatpush1.xpose.msra.mxu0 0.0
        %564 = vmatprep.subr.mxu0 0.0
        %565 = vmatpush1.xpose.msra.mxu0 0.0
        %566 = vmatprep.subr.mxu0 0.0
        %567 = vmatpush1.xpose.msra.mxu0 0.0
        %568 = vmatprep.subr.mxu0 0.0
        %569 = vmatpush1.xpose.msra.mxu0 0.0
        %570 = vmatprep.subr.mxu0 0.0
        %571 = vmatpush1.xpose.msra.mxu0 0.0
        %572 = vmatprep.subr.mxu0 0.0
        %573 = vmatpush1.xpose.msra.mxu0 0.0
        %574 = vmatprep.subr.mxu0 0.0
        %575 = vmatpush1.xpose.msra.mxu0 0.0
        %576 = vmatprep.subr.mxu0 0.0
        %577 = vmatpush1.xpose.msra.mxu0 0.0
        %578 = vmatprep.subr.mxu0 0.0
        %579 = vmatpush1.xpose.msra.mxu0 0.0
        %580 = vmatprep.subr.mxu0 0.0
        %581 = vmatpush1.xpose.msra.mxu0 0.0
        %582 = vmatprep.subr.mxu0 0.0
        %583 = vmatpush1.xpose.msra.mxu0 0.0
        %584 = vmatprep.subr.mxu0 0.0
        %585 = vmatpush1.xpose.msra.mxu0 0.0
        %586 = vmatprep.subr.mxu0 0.0
        %587 = vmatpush1.xpose.msra.mxu0 0.0
        %588 = vmatprep.subr.mxu0 0.0
        %589 = vmatpush1.xpose.msra.mxu0 0.0
        %590 = vmatprep.subr.mxu0 0.0
        %591 = vmatpush1.xpose.msra.mxu0 0.0
        %592 = vmatprep.subr.mxu0 0.0
        %593 = vmatpush1.xpose.msra.mxu0 0.0
        %594 = vmatprep.subr.mxu0 0.0
        %595 = vmatpush1.xpose.msra.mxu0 0.0
        %596 = vmatprep.subr.mxu0 0.0
        %597 = vmatpush1.xpose.msra.mxu0 0.0
        %598 = vmatprep.subr.mxu0 0.0
        %599 = vmatpush1.xpose.msra.mxu0 0.0
        %600 = vmatprep.subr.mxu0 0.0
        %601 = vmatpush1.xpose.msra.mxu0 0.0
        %602 = vmatprep.subr.mxu0 0.0
        %603 = vmatpush1.xpose.msra.mxu0 0.0
        %604 = vmatprep.subr.mxu0 0.0
        %605 = vmatpush1.xpose.msra.mxu0 0.0
        %606 = vmatprep.subr.mxu0 0.0
        %607 = vmatpush1.xpose.msra.mxu0 0.0
        %608 = vmatprep.subr.mxu0 0.0
        %609 = vmatpush1.xpose.msra.mxu0 0.0
        %610 = vmatprep.mubr.f32.mxu0 0.0
        %611 = vmatmul.mubr.f32.gmra.mrb[0].mxu0 %v541
        %v612 = vpop.f32.mrb[0].mxu0
        %v613 = vadd.f32 0.0, %v612
        %v614 = vpop.f32.mrb[0].mxu0
        %615 = vdwg.mxu0
        %v617 = vsel %vm539, %v350, 0
        %v620 = vsel %vm539, %v445, 0
        %622 = vmatprep.subr.mxu0 0.0
        %623 = vmatpush1.xpose.msra.mxu0 %v620
        %624 = vmatprep.subr.mxu0 0.0
        %625 = vmatpush1.xpose.msra.mxu0 0.0
        %626 = vmatprep.subr.mxu0 0.0
        %627 = vmatpush1.xpose.msra.mxu0 0.0
        %628 = vmatprep.subr.mxu0 0.0
        %629 = vmatpush1.xpose.msra.mxu0 0.0
        %630 = vmatprep.subr.mxu0 0.0
        %631 = vmatpush1.xpose.msra.mxu0 0.0
        %632 = vmatprep.subr.mxu0 0.0
        %633 = vmatpush1.xpose.msra.mxu0 0.0
        %634 = vmatprep.subr.mxu0 0.0
        %635 = vmatpush1.xpose.msra.mxu0 0.0
        %636 = vmatprep.subr.mxu0 0.0
        %637 = vmatpush1.xpose.msra.mxu0 0.0
        %638 = vmatprep.subr.mxu0 0.0
        %639 = vmatpush1.xpose.msra.mxu0 0.0
        %640 = vmatprep.subr.mxu0 0.0
        %641 = vmatpush1.xpose.msra.mxu0 0.0
        %642 = vmatprep.subr.mxu0 0.0
        %643 = vmatpush1.xpose.msra.mxu0 0.0
        %644 = vmatprep.subr.mxu0 0.0
        %645 = vmatpush1.xpose.msra.mxu0 0.0
        %646 = vmatprep.subr.mxu0 0.0
        %647 = vmatpush1.xpose.msra.mxu0 0.0
        %648 = vmatprep.subr.mxu0 0.0
        %649 = vmatpush1.xpose.msra.mxu0 0.0
        %650 = vmatprep.subr.mxu0 0.0
        %651 = vmatpush1.xpose.msra.mxu0 0.0
        %652 = vmatprep.subr.mxu0 0.0
        %653 = vmatpush1.xpose.msra.mxu0 0.0
        %654 = vmatprep.subr.mxu0 0.0
        %655 = vmatpush1.xpose.msra.mxu0 0.0
        %656 = vmatprep.subr.mxu0 0.0
        %657 = vmatpush1.xpose.msra.mxu0 0.0
        %658 = vmatprep.subr.mxu0 0.0
        %659 = vmatpush1.xpose.msra.mxu0 0.0
        %660 = vmatprep.subr.mxu0 0.0
        %661 = vmatpush1.xpose.msra.mxu0 0.0
        %662 = vmatprep.subr.mxu0 0.0
        %663 = vmatpush1.xpose.msra.mxu0 0.0
        %664 = vmatprep.subr.mxu0 0.0
        %665 = vmatpush1.xpose.msra.mxu0 0.0
        %666 = vmatprep.subr.mxu0 0.0
        %667 = vmatpush1.xpose.msra.mxu0 0.0
        %668 = vmatprep.subr.mxu0 0.0
        %669 = vmatpush1.xpose.msra.mxu0 0.0
        %670 = vmatprep.subr.mxu0 0.0
        %671 = vmatpush1.xpose.msra.mxu0 0.0
        %672 = vmatprep.subr.mxu0 0.0
        %673 = vmatpush1.xpose.msra.mxu0 0.0
        %674 = vmatprep.subr.mxu0 0.0
        %675 = vmatpush1.xpose.msra.mxu0 0.0
        %676 = vmatprep.subr.mxu0 0.0
        %677 = vmatpush1.xpose.msra.mxu0 0.0
        %678 = vmatprep.subr.mxu0 0.0
        %679 = vmatpush1.xpose.msra.mxu0 0.0
        %680 = vmatprep.subr.mxu0 0.0
        %681 = vmatpush1.xpose.msra.mxu0 0.0
        %682 = vmatprep.subr.mxu0 0.0
        %683 = vmatpush1.xpose.msra.mxu0 0.0
        %684 = vmatprep.subr.mxu0 0.0
        %685 = vmatpush1.xpose.msra.mxu0 0.0
        %686 = vmatprep.mubr.f32.mxu0 0.0
        %687 = vmatmul.mubr.f32.gmra.mrb[0].mxu0 %v617
        %v688 = vpop.f32.mrb[0].mxu0
        %v689 = vadd.f32 0.0, %v688
        %v690 = vpop.f32.mrb[0].mxu0
        %691 = vdwg.mxu0
        %v692 = vsel %vm539, %v613, -inf
        %693 = vmax.xlane.f32.xlu0 %v692
        %v694 = vpop.xlane.xlu0 %693
        %v695 = vsel %vm539, %v689, -inf
        %696 = vmax.xlane.f32.xlu0 %v695
        %v697 = vpop.xlane.xlu0 %696
        %v698 = vsub.f32 %v613, %v694
        %v699 = vsub.f32 %v689, %v697
        %v700 = vmul.f32 %v698, 1.442695
        %v701 = vpow.pop %v700
        %v702 = vmul.f32 %v699, 1.442695
        %v703 = vpow.pop %v702
        %v704 = vsel %vm539, %v701, 0.0
        %705 = vadd.xlane.f32.xlu0 %v704
        %v706 = vpop.xlane.xlu0 %705
        %v707 = vsel %vm539, %v703, 0.0
        %708 = vadd.xlane.f32.xlu0 %v707
        %v709 = vpop.xlane.xlu0 %708
        %v710 = vrcp.pop %v706
        %v711 = vmul.f32 %v701, %v710
        %v712 = vrcp.pop %v709
        %v713 = vmul.f32 %v703, %v712
        %v715 = vsel %vm539, %v711, 0
        %717 = vmatprep.subr.mxu0 0.0
        %718 = vmatpush1.msra.mxu0 %v531
        %719 = vmatprep.subr.mxu0 0.0
        %720 = vmatpush1.msra.mxu0 0.0
        %721 = vmatprep.subr.mxu0 0.0
        %722 = vmatpush1.msra.mxu0 0.0
        %723 = vmatprep.subr.mxu0 0.0
        %724 = vmatpush1.msra.mxu0 0.0
        %725 = vmatprep.subr.mxu0 0.0
        %726 = vmatpush1.msra.mxu0 0.0
        %727 = vmatprep.subr.mxu0 0.0
        %728 = vmatpush1.msra.mxu0 0.0
        %729 = vmatprep.subr.mxu0 0.0
        %730 = vmatpush1.msra.mxu0 0.0
        %731 = vmatprep.subr.mxu0 0.0
        %732 = vmatpush1.msra.mxu0 0.0
        %733 = vmatprep.subr.mxu0 0.0
        %734 = vmatpush1.msra.mxu0 0.0
        %735 = vmatprep.subr.mxu0 0.0
        %736 = vmatpush1.msra.mxu0 0.0
        %737 = vmatprep.subr.mxu0 0.0
        %738 = vmatpush1.msra.mxu0 0.0
        %739 = vmatprep.subr.mxu0 0.0
        %740 = vmatpush1.msra.mxu0 0.0
        %741 = vmatprep.subr.mxu0 0.0
        %742 = vmatpush1.msra.mxu0 0.0
        %743 = vmatprep.subr.mxu0 0.0
        %744 = vmatpush1.msra.mxu0 0.0
        %745 = vmatprep.subr.mxu0 0.0
        %746 = vmatpush1.msra.mxu0 0.0
        %747 = vmatprep.subr.mxu0 0.0
        %748 = vmatpush1.msra.mxu0 0.0
        %749 = vmatprep.subr.mxu0 0.0
        %750 = vmatpush1.msra.mxu0 0.0
        %751 = vmatprep.subr.mxu0 0.0
        %752 = vmatpush1.msra.mxu0 0.0
        %753 = vmatprep.subr.mxu0 0.0
        %754 = vmatpush1.msra.mxu0 0.0
        %755 = vmatprep.subr.mxu0 0.0
        %756 = vmatpush1.msra.mxu0 0.0
        %757 = vmatprep.subr.mxu0 0.0
        %758 = vmatpush1.msra.mxu0 0.0
        %759 = vmatprep.subr.mxu0 0.0
        %760 = vmatpush1.msra.mxu0 0.0
        %761 = vmatprep.subr.mxu0 0.0
        %762 = vmatpush1.msra.mxu0 0.0
        %763 = vmatprep.subr.mxu0 0.0
        %764 = vmatpush1.msra.mxu0 0.0
        %765 = vmatprep.subr.mxu0 0.0
        %766 = vmatpush1.msra.mxu0 0.0
        %767 = vmatprep.subr.mxu0 0.0
        %768 = vmatpush1.msra.mxu0 0.0
        %769 = vmatprep.subr.mxu0 0.0
        %770 = vmatpush1.msra.mxu0 0.0
        %771 = vmatprep.subr.mxu0 0.0
        %772 = vmatpush1.msra.mxu0 0.0
        %773 = vmatprep.subr.mxu0 0.0
        %774 = vmatpush1.msra.mxu0 0.0
        %775 = vmatprep.subr.mxu0 0.0
        %776 = vmatpush1.msra.mxu0 0.0
        %777 = vmatprep.subr.mxu0 0.0
        %778 = vmatpush1.msra.mxu0 0.0
        %779 = vmatprep.subr.mxu0 0.0
        %780 = vmatpush1.msra.mxu0 0.0
        %781 = vmatprep.mubr.f32.mxu0 0.0
        %782 = vmatmul.mubr.f32.gmra.mrb[0].mxu0 %v715
        %v783 = vpop.f32.mrb[0].mxu0
        %v784 = vadd.f32 0.0, %v783
        %v785 = vpop.f32.mrb[0].mxu0
        %786 = vdwg.mxu0
        %v788 = vsel %vm539, %v713, 0
        %790 = vmatprep.subr.mxu0 0.0
        %791 = vmatpush1.msra.mxu0 %v536
        %792 = vmatprep.subr.mxu0 0.0
        %793 = vmatpush1.msra.mxu0 0.0
        %794 = vmatprep.subr.mxu0 0.0
        %795 = vmatpush1.msra.mxu0 0.0
        %796 = vmatprep.subr.mxu0 0.0
        %797 = vmatpush1.msra.mxu0 0.0
        %798 = vmatprep.subr.mxu0 0.0
        %799 = vmatpush1.msra.mxu0 0.0
        %800 = vmatprep.subr.mxu0 0.0
        %801 = vmatpush1.msra.mxu0 0.0
        %802 = vmatprep.subr.mxu0 0.0
        %803 = vmatpush1.msra.mxu0 0.0
        %804 = vmatprep.subr.mxu0 0.0
        %805 = vmatpush1.msra.mxu0 0.0
        %806 = vmatprep.subr.mxu0 0.0
        %807 = vmatpush1.msra.mxu0 0.0
        %808 = vmatprep.subr.mxu0 0.0
        %809 = vmatpush1.msra.mxu0 0.0
        %810 = vmatprep.subr.mxu0 0.0
        %811 = vmatpush1.msra.mxu0 0.0
        %812 = vmatprep.subr.mxu0 0.0
        %813 = vmatpush1.msra.mxu0 0.0
        %814 = vmatprep.subr.mxu0 0.0
        %815 = vmatpush1.msra.mxu0 0.0
        %816 = vmatprep.subr.mxu0 0.0
        %817 = vmatpush1.msra.mxu0 0.0
        %818 = vmatprep.subr.mxu0 0.0
        %819 = vmatpush1.msra.mxu0 0.0
        %820 = vmatprep.subr.mxu0 0.0
        %821 = vmatpush1.msra.mxu0 0.0
        %822 = vmatprep.subr.mxu0 0.0
        %823 = vmatpush1.msra.mxu0 0.0
        %824 = vmatprep.subr.mxu0 0.0
        %825 = vmatpush1.msra.mxu0 0.0
        %826 = vmatprep.subr.mxu0 0.0
        %827 = vmatpush1.msra.mxu0 0.0
        %828 = vmatprep.subr.mxu0 0.0
        %829 = vmatpush1.msra.mxu0 0.0
        %830 = vmatprep.subr.mxu0 0.0
        %831 = vmatpush1.msra.mxu0 0.0
        %832 = vmatprep.subr.mxu0 0.0
        %833 = vmatpush1.msra.mxu0 0.0
        %834 = vmatprep.subr.mxu0 0.0
        %835 = vmatpush1.msra.mxu0 0.0
        %836 = vmatprep.subr.mxu0 0.0
        %837 = vmatpush1.msra.mxu0 0.0
        %838 = vmatprep.subr.mxu0 0.0
        %839 = vmatpush1.msra.mxu0 0.0
        %840 = vmatprep.subr.mxu0 0.0
        %841 = vmatpush1.msra.mxu0 0.0
        %842 = vmatprep.subr.mxu0 0.0
        %843 = vmatpush1.msra.mxu0 0.0
        %844 = vmatprep.subr.mxu0 0.0
        %845 = vmatpush1.msra.mxu0 0.0
        %846 = vmatprep.subr.mxu0 0.0
        %847 = vmatpush1.msra.mxu0 0.0
        %848 = vmatprep.subr.mxu0 0.0
        %849 = vmatpush1.msra.mxu0 0.0
        %850 = vmatprep.subr.mxu0 0.0
        %851 = vmatpush1.msra.mxu0 0.0
        %852 = vmatprep.subr.mxu0 0.0
        %853 = vmatpush1.msra.mxu0 0.0
        %854 = vmatprep.mubr.f32.mxu0 0.0
        %855 = vmatmul.mubr.f32.gmra.mrb[0].mxu0 %v788
        %v856 = vpop.f32.mrb[0].mxu0
        %v857 = vadd.f32 0.0, %v856
        %v858 = vpop.f32.mrb[0].mxu0
        %859 = vdwg.mxu0
        %860 = vrot.lane.b32.xlu0 %v349, 120
        %v861 = vpop.permute.xlu0 %860
        %862 = vrot.lane.b32.xlu0 %v440, 120
        %v863 = vpop.permute.xlu0 %862
        %v864 = vsel %vm539, %v861, 0
        %v866 = vsel %vm539, %v863, 0
        %868 = vmatprep.subr.mxu0 0.0
        %869 = vmatpush1.xpose.msra.mxu0 %v866
        %870 = vmatprep.subr.mxu0 0.0
        %871 = vmatpush1.xpose.msra.mxu0 0.0
        %872 = vmatprep.subr.mxu0 0.0
        %873 = vmatpush1.xpose.msra.mxu0 0.0
        %874 = vmatprep.subr.mxu0 0.0
        %875 = vmatpush1.xpose.msra.mxu0 0.0
        %876 = vmatprep.subr.mxu0 0.0
        %877 = vmatpush1.xpose.msra.mxu0 0.0
        %878 = vmatprep.subr.mxu0 0.0
        %879 = vmatpush1.xpose.msra.mxu0 0.0
        %880 = vmatprep.subr.mxu0 0.0
        %881 = vmatpush1.xpose.msra.mxu0 0.0
        %882 = vmatprep.subr.mxu0 0.0
        %883 = vmatpush1.xpose.msra.mxu0 0.0
        %884 = vmatprep.subr.mxu0 0.0
        %885 = vmatpush1.xpose.msra.mxu0 0.0
        %886 = vmatprep.subr.mxu0 0.0
        %887 = vmatpush1.xpose.msra.mxu0 0.0
        %888 = vmatprep.subr.mxu0 0.0
        %889 = vmatpush1.xpose.msra.mxu0 0.0
        %890 = vmatprep.subr.mxu0 0.0
        %891 = vmatpush1.xpose.msra.mxu0 0.0
        %892 = vmatprep.subr.mxu0 0.0
        %893 = vmatpush1.xpose.msra.mxu0 0.0
        %894 = vmatprep.subr.mxu0 0.0
        %895 = vmatpush1.xpose.msra.mxu0 0.0
        %896 = vmatprep.subr.mxu0 0.0
        %897 = vmatpush1.xpose.msra.mxu0 0.0
        %898 = vmatprep.subr.mxu0 0.0
        %899 = vmatpush1.xpose.msra.mxu0 0.0
        %900 = vmatprep.subr.mxu0 0.0
        %901 = vmatpush1.xpose.msra.mxu0 0.0
        %902 = vmatprep.subr.mxu0 0.0
        %903 = vmatpush1.xpose.msra.mxu0 0.0
        %904 = vmatprep.subr.mxu0 0.0
        %905 = vmatpush1.xpose.msra.mxu0 0.0
        %906 = vmatprep.subr.mxu0 0.0
        %907 = vmatpush1.xpose.msra.mxu0 0.0
        %908 = vmatprep.subr.mxu0 0.0
        %909 = vmatpush1.xpose.msra.mxu0 0.0
        %910 = vmatprep.subr.mxu0 0.0
        %911 = vmatpush1.xpose.msra.mxu0 0.0
        %912 = vmatprep.subr.mxu0 0.0
        %913 = vmatpush1.xpose.msra.mxu0 0.0
        %914 = vmatprep.subr.mxu0 0.0
        %915 = vmatpush1.xpose.msra.mxu0 0.0
        %916 = vmatprep.subr.mxu0 0.0
        %917 = vmatpush1.xpose.msra.mxu0 0.0
        %918 = vmatprep.subr.mxu0 0.0
        %919 = vmatpush1.xpose.msra.mxu0 0.0
        %920 = vmatprep.subr.mxu0 0.0
        %921 = vmatpush1.xpose.msra.mxu0 0.0
        %922 = vmatprep.subr.mxu0 0.0
        %923 = vmatpush1.xpose.msra.mxu0 0.0
        %924 = vmatprep.subr.mxu0 0.0
        %925 = vmatpush1.xpose.msra.mxu0 0.0
        %926 = vmatprep.subr.mxu0 0.0
        %927 = vmatpush1.xpose.msra.mxu0 0.0
        %928 = vmatprep.subr.mxu0 0.0
        %929 = vmatpush1.xpose.msra.mxu0 0.0
        %930 = vmatprep.subr.mxu0 0.0
        %931 = vmatpush1.xpose.msra.mxu0 0.0
        %932 = vmatprep.mubr.f32.mxu0 0.0
        %933 = vmatmul.mubr.f32.gmra.mrb[0].mxu0 %v864
        %v934 = vpop.f32.mrb[0].mxu0
        %v935 = vadd.f32 0.0, %v934
        %v936 = vpop.f32.mrb[0].mxu0
        %937 = vdwg.mxu0
        %938 = vrot.lane.b32.xlu0 %v350, 120
        %v939 = vpop.permute.xlu0 %938
        %940 = vrot.lane.b32.xlu0 %v445, 120
        %v941 = vpop.permute.xlu0 %940
        %v942 = vsel %vm539, %v939, 0
        %v944 = vsel %vm539, %v941, 0
        %946 = vmatprep.subr.mxu0 0.0
        %947 = vmatpush1.xpose.msra.mxu0 %v944
        %948 = vmatprep.subr.mxu0 0.0
        %949 = vmatpush1.xpose.msra.mxu0 0.0
        %950 = vmatprep.subr.mxu0 0.0
        %951 = vmatpush1.xpose.msra.mxu0 0.0
        %952 = vmatprep.subr.mxu0 0.0
        %953 = vmatpush1.xpose.msra.mxu0 0.0
        %954 = vmatprep.subr.mxu0 0.0
        %955 = vmatpush1.xpose.msra.mxu0 0.0
        %956 = vmatprep.subr.mxu0 0.0
        %957 = vmatpush1.xpose.msra.mxu0 0.0
        %958 = vmatprep.subr.mxu0 0.0
        %959 = vmatpush1.xpose.msra.mxu0 0.0
        %960 = vmatprep.subr.mxu0 0.0
        %961 = vmatpush1.xpose.msra.mxu0 0.0
        %962 = vmatprep.subr.mxu0 0.0
        %963 = vmatpush1.xpose.msra.mxu0 0.0
        %964 = vmatprep.subr.mxu0 0.0
        %965 = vmatpush1.xpose.msra.mxu0 0.0
        %966 = vmatprep.subr.mxu0 0.0
        %967 = vmatpush1.xpose.msra.mxu0 0.0
        %968 = vmatprep.subr.mxu0 0.0
        %969 = vmatpush1.xpose.msra.mxu0 0.0
        %970 = vmatprep.subr.mxu0 0.0
        %971 = vmatpush1.xpose.msra.mxu0 0.0
        %972 = vmatprep.subr.mxu0 0.0
        %973 = vmatpush1.xpose.msra.mxu0 0.0
        %974 = vmatprep.subr.mxu0 0.0
        %975 = vmatpush1.xpose.msra.mxu0 0.0
        %976 = vmatprep.subr.mxu0 0.0
        %977 = vmatpush1.xpose.msra.mxu0 0.0
        %978 = vmatprep.subr.mxu0 0.0
        %979 = vmatpush1.xpose.msra.mxu0 0.0
        %980 = vmatprep.subr.mxu0 0.0
        %981 = vmatpush1.xpose.msra.mxu0 0.0
        %982 = vmatprep.subr.mxu0 0.0
        %983 = vmatpush1.xpose.msra.mxu0 0.0
        %984 = vmatprep.subr.mxu0 0.0
        %985 = vmatpush1.xpose.msra.mxu0 0.0
        %986 = vmatprep.subr.mxu0 0.0
        %987 = vmatpush1.xpose.msra.mxu0 0.0
        %988 = vmatprep.subr.mxu0 0.0
        %989 = vmatpush1.xpose.msra.mxu0 0.0
        %990 = vmatprep.subr.mxu0 0.0
        %991 = vmatpush1.xpose.msra.mxu0 0.0
        %992 = vmatprep.subr.mxu0 0.0
        %993 = vmatpush1.xpose.msra.mxu0 0.0
        %994 = vmatprep.subr.mxu0 0.0
        %995 = vmatpush1.xpose.msra.mxu0 0.0
        %996 = vmatprep.subr.mxu0 0.0
        %997 = vmatpush1.xpose.msra.mxu0 0.0
        %998 = vmatprep.subr.mxu0 0.0
        %999 = vmatpush1.xpose.msra.mxu0 0.0
        %1000 = vmatprep.subr.mxu0 0.0
        %1001 = vmatpush1.xpose.msra.mxu0 0.0
        %1002 = vmatprep.subr.mxu0 0.0
        %1003 = vmatpush1.xpose.msra.mxu0 0.0
        %1004 = vmatprep.subr.mxu0 0.0
        %1005 = vmatpush1.xpose.msra.mxu0 0.0
        %1006 = vmatprep.subr.mxu0 0.0
        %1007 = vmatpush1.xpose.msra.mxu0 0.0
        %1008 = vmatprep.subr.mxu0 0.0
        %1009 = vmatpush1.xpose.msra.mxu0 0.0
        %1010 = vmatprep.mubr.f32.mxu0 0.0
        %1011 = vmatmul.mubr.f32.gmra.mrb[0].mxu0 %v942
        %v1012 = vpop.f32.mrb[0].mxu0
        %v1013 = vadd.f32 0.0, %v1012
        %v1014 = vpop.f32.mrb[0].mxu0
        %1015 = vdwg.mxu0
        %v1016 = vsel %vm539, %v935, -inf
        %1017 = vmax.xlane.f32.xlu0 %v1016
        %v1018 = vpop.xlane.xlu0 %1017
        %v1019 = vsel %vm539, %v1013, -inf
        %1020 = vmax.xlane.f32.xlu0 %v1019
        %v1021 = vpop.xlane.xlu0 %1020
        %v1022 = vsub.f32 %v935, %v1018
        %v1023 = vsub.f32 %v1013, %v1021
        %v1024 = vmul.f32 %v1022, 1.442695
        %v1025 = vpow.pop %v1024
        %v1026 = vmul.f32 %v1023, 1.442695
        %v1027 = vpow.pop %v1026
        %v1028 = vsel %vm539, %v1025, 0.0
        %1029 = vadd.xlane.f32.xlu0 %v1028
        %v1030 = vpop.xlane.xlu0 %1029
        %v1031 = vsel %vm539, %v1027, 0.0
        %1032 = vadd.xlane.f32.xlu0 %v1031
        %v1033 = vpop.xlane.xlu0 %1032
        %v1034 = vrcp.pop %v1030
        %v1035 = vmul.f32 %v1025, %v1034
        %v1036 = vrcp.pop %v1033
        %v1037 = vmul.f32 %v1027, %v1036
        %1039 = vrot.lane.b32.xlu0 %v531, 120
        %v1040 = vpop.permute.xlu0 %1039
        %v1043 = vsel %vm539, %v1035, 0
        %1045 = vmatprep.subr.mxu0 0.0
        %1046 = vmatpush1.msra.mxu0 %v1040
        %1047 = vmatprep.subr.mxu0 0.0
        %1048 = vmatpush1.msra.mxu0 0.0
        %1049 = vmatprep.subr.mxu0 0.0
        %1050 = vmatpush1.msra.mxu0 0.0
        %1051 = vmatprep.subr.mxu0 0.0
        %1052 = vmatpush1.msra.mxu0 0.0
        %1053 = vmatprep.subr.mxu0 0.0
        %1054 = vmatpush1.msra.mxu0 0.0
        %1055 = vmatprep.subr.mxu0 0.0
        %1056 = vmatpush1.msra.mxu0 0.0
        %1057 = vmatprep.subr.mxu0 0.0
        %1058 = vmatpush1.msra.mxu0 0.0
        %1059 = vmatprep.subr.mxu0 0.0
        %1060 = vmatpush1.msra.mxu0 0.0
        %1061 = vmatprep.subr.mxu0 0.0
        %1062 = vmatpush1.msra.mxu0 0.0
        %1063 = vmatprep.subr.mxu0 0.0
        %1064 = vmatpush1.msra.mxu0 0.0
        %1065 = vmatprep.subr.mxu0 0.0
        %1066 = vmatpush1.msra.mxu0 0.0
        %1067 = vmatprep.subr.mxu0 0.0
        %1068 = vmatpush1.msra.mxu0 0.0
        %1069 = vmatprep.subr.mxu0 0.0
        %1070 = vmatpush1.msra.mxu0 0.0
        %1071 = vmatprep.subr.mxu0 0.0
        %1072 = vmatpush1.msra.mxu0 0.0
        %1073 = vmatprep.subr.mxu0 0.0
        %1074 = vmatpush1.msra.mxu0 0.0
        %1075 = vmatprep.subr.mxu0 0.0
        %1076 = vmatpush1.msra.mxu0 0.0
        %1077 = vmatprep.subr.mxu0 0.0
        %1078 = vmatpush1.msra.mxu0 0.0
        %1079 = vmatprep.subr.mxu0 0.0
        %1080 = vmatpush1.msra.mxu0 0.0
        %1081 = vmatprep.subr.mxu0 0.0
        %1082 = vmatpush1.msra.mxu0 0.0
        %1083 = vmatprep.subr.mxu0 0.0
        %1084 = vmatpush1.msra.mxu0 0.0
        %1085 = vmatprep.subr.mxu0 0.0
        %1086 = vmatpush1.msra.mxu0 0.0
        %1087 = vmatprep.subr.mxu0 0.0
        %1088 = vmatpush1.msra.mxu0 0.0
        %1089 = vmatprep.subr.mxu0 0.0
        %1090 = vmatpush1.msra.mxu0 0.0
        %1091 = vmatprep.subr.mxu0 0.0
        %1092 = vmatpush1.msra.mxu0 0.0
        %1093 = vmatprep.subr.mxu0 0.0
        %1094 = vmatpush1.msra.mxu0 0.0
        %1095 = vmatprep.subr.mxu0 0.0
        %1096 = vmatpush1.msra.mxu0 0.0
        %1097 = vmatprep.subr.mxu0 0.0
        %1098 = vmatpush1.msra.mxu0 0.0
        %1099 = vmatprep.subr.mxu0 0.0
        %1100 = vmatpush1.msra.mxu0 0.0
        %1101 = vmatprep.subr.mxu0 0.0
        %1102 = vmatpush1.msra.mxu0 0.0
        %1103 = vmatprep.subr.mxu0 0.0
        %1104 = vmatpush1.msra.mxu0 0.0
        %1105 = vmatprep.subr.mxu0 0.0
        %1106 = vmatpush1.msra.mxu0 0.0
        %1107 = vmatprep.subr.mxu0 0.0
        %1108 = vmatpush1.msra.mxu0 0.0
        %1109 = vmatprep.mubr.f32.mxu0 0.0
        %1110 = vmatmul.mubr.f32.gmra.mrb[0].mxu0 %v1043
        %v1111 = vpop.f32.mrb[0].mxu0
        %v1112 = vadd.f32 0.0, %v1111
        %v1113 = vpop.f32.mrb[0].mxu0
        %1114 = vdwg.mxu0
        %1116 = vrot.lane.b32.xlu0 %v536, 120
        %v1117 = vpop.permute.xlu0 %1116
        %v1120 = vsel %vm539, %v1037, 0
        %1122 = vmatprep.subr.mxu0 0.0
        %1123 = vmatpush1.msra.mxu0 %v1117
        %1124 = vmatprep.subr.mxu0 0.0
        %1125 = vmatpush1.msra.mxu0 0.0
        %1126 = vmatprep.subr.mxu0 0.0
        %1127 = vmatpush1.msra.mxu0 0.0
        %1128 = vmatprep.subr.mxu0 0.0
        %1129 = vmatpush1.msra.mxu0 0.0
        %1130 = vmatprep.subr.mxu0 0.0
        %1131 = vmatpush1.msra.mxu0 0.0
        %1132 = vmatprep.subr.mxu0 0.0
        %1133 = vmatpush1.msra.mxu0 0.0
        %1134 = vmatprep.subr.mxu0 0.0
        %1135 = vmatpush1.msra.mxu0 0.0
        %1136 = vmatprep.subr.mxu0 0.0
        %1137 = vmatpush1.msra.mxu0 0.0
        %1138 = vmatprep.subr.mxu0 0.0
        %1139 = vmatpush1.msra.mxu0 0.0
        %1140 = vmatprep.subr.mxu0 0.0
        %1141 = vmatpush1.msra.mxu0 0.0
        %1142 = vmatprep.subr.mxu0 0.0
        %1143 = vmatpush1.msra.mxu0 0.0
        %1144 = vmatprep.subr.mxu0 0.0
        %1145 = vmatpush1.msra.mxu0 0.0
        %1146 = vmatprep.subr.mxu0 0.0
        %1147 = vmatpush1.msra.mxu0 0.0
        %1148 = vmatprep.subr.mxu0 0.0
        %1149 = vmatpush1.msra.mxu0 0.0
        %1150 = vmatprep.subr.mxu0 0.0
        %1151 = vmatpush1.msra.mxu0 0.0
        %1152 = vmatprep.subr.mxu0 0.0
        %1153 = vmatpush1.msra.mxu0 0.0
        %1154 = vmatprep.subr.mxu0 0.0
        %1155 = vmatpush1.msra.mxu0 0.0
        %1156 = vmatprep.subr.mxu0 0.0
        %1157 = vmatpush1.msra.mxu0 0.0
        %1158 = vmatprep.subr.mxu0 0.0
        %1159 = vmatpush1.msra.mxu0 0.0
        %1160 = vmatprep.subr.mxu0 0.0
        %1161 = vmatpush1.msra.mxu0 0.0
        %1162 = vmatprep.subr.mxu0 0.0
        %1163 = vmatpush1.msra.mxu0 0.0
        %1164 = vmatprep.subr.mxu0 0.0
        %1165 = vmatpush1.msra.mxu0 0.0
        %1166 = vmatprep.subr.mxu0 0.0
        %1167 = vmatpush1.msra.mxu0 0.0
        %1168 = vmatprep.subr.mxu0 0.0
        %1169 = vmatpush1.msra.mxu0 0.0
        %1170 = vmatprep.subr.mxu0 0.0
        %1171 = vmatpush1.msra.mxu0 0.0
        %1172 = vmatprep.subr.mxu0 0.0
        %1173 = vmatpush1.msra.mxu0 0.0
        %1174 = vmatprep.subr.mxu0 0.0
        %1175 = vmatpush1.msra.mxu0 0.0
        %1176 = vmatprep.subr.mxu0 0.0
        %1177 = vmatpush1.msra.mxu0 0.0
        %1178 = vmatprep.subr.mxu0 0.0
        %1179 = vmatpush1.msra.mxu0 0.0
        %1180 = vmatprep.subr.mxu0 0.0
        %1181 = vmatpush1.msra.mxu0 0.0
        %1182 = vmatprep.subr.mxu0 0.0
        %1183 = vmatpush1.msra.mxu0 0.0
        %1184 = vmatprep.subr.mxu0 0.0
        %1185 = vmatpush1.msra.mxu0 0.0
        %1186 = vmatprep.mubr.f32.mxu0 0.0
        %1187 = vmatmul.mubr.f32.gmra.mrb[0].mxu0 %v1120
        %v1188 = vpop.f32.mrb[0].mxu0
        %v1189 = vadd.f32 0.0, %v1188
        %v1190 = vpop.f32.mrb[0].mxu0
        %1191 = vdwg.mxu0
        %1192 = vrot.lane.b32.xlu0 %v349, 112
        %v1193 = vpop.permute.xlu0 %1192
        %1194 = vrot.lane.b32.xlu0 %v440, 112
        %v1195 = vpop.permute.xlu0 %1194
        %v1196 = vsel %vm539, %v1193, 0
        %v1198 = vsel %vm539, %v1195, 0
        %1200 = vmatprep.subr.mxu0 0.0
        %1201 = vmatpush1.xpose.msra.mxu0 %v1198
        %1202 = vmatprep.subr.mxu0 0.0
        %1203 = vmatpush1.xpose.msra.mxu0 0.0
        %1204 = vmatprep.subr.mxu0 0.0
        %1205 = vmatpush1.xpose.msra.mxu0 0.0
        %1206 = vmatprep.subr.mxu0 0.0
        %1207 = vmatpush1.xpose.msra.mxu0 0.0
        %1208 = vmatprep.subr.mxu0 0.0
        %1209 = vmatpush1.xpose.msra.mxu0 0.0
        %1210 = vmatprep.subr.mxu0 0.0
        %1211 = vmatpush1.xpose.msra.mxu0 0.0
        %1212 = vmatprep.subr.mxu0 0.0
        %1213 = vmatpush1.xpose.msra.mxu0 0.0
        %1214 = vmatprep.subr.mxu0 0.0
        %1215 = vmatpush1.xpose.msra.mxu0 0.0
        %1216 = vmatprep.subr.mxu0 0.0
        %1217 = vmatpush1.xpose.msra.mxu0 0.0
        %1218 = vmatprep.subr.mxu0 0.0
        %1219 = vmatpush1.xpose.msra.mxu0 0.0
        %1220 = vmatprep.subr.mxu0 0.0
        %1221 = vmatpush1.xpose.msra.mxu0 0.0
        %1222 = vmatprep.subr.mxu0 0.0
        %1223 = vmatpush1.xpose.msra.mxu0 0.0
        %1224 = vmatprep.subr.mxu0 0.0
        %1225 = vmatpush1.xpose.msra.mxu0 0.0
        %1226 = vmatprep.subr.mxu0 0.0
        %1227 = vmatpush1.xpose.msra.mxu0 0.0
        %1228 = vmatprep.subr.mxu0 0.0
        %1229 = vmatpush1.xpose.msra.mxu0 0.0
        %1230 = vmatprep.subr.mxu0 0.0
        %1231 = vmatpush1.xpose.msra.mxu0 0.0
        %1232 = vmatprep.subr.mxu0 0.0
        %1233 = vmatpush1.xpose.msra.mxu0 0.0
        %1234 = vmatprep.subr.mxu0 0.0
        %1235 = vmatpush1.xpose.msra.mxu0 0.0
        %1236 = vmatprep.subr.mxu0 0.0
        %1237 = vmatpush1.xpose.msra.mxu0 0.0
        %1238 = vmatprep.subr.mxu0 0.0
        %1239 = vmatpush1.xpose.msra.mxu0 0.0
        %1240 = vmatprep.subr.mxu0 0.0
        %1241 = vmatpush1.xpose.msra.mxu0 0.0
        %1242 = vmatprep.subr.mxu0 0.0
        %1243 = vmatpush1.xpose.msra.mxu0 0.0
        %1244 = vmatprep.subr.mxu0 0.0
        %1245 = vmatpush1.xpose.msra.mxu0 0.0
        %1246 = vmatprep.subr.mxu0 0.0
        %1247 = vmatpush1.xpose.msra.mxu0 0.0
        %1248 = vmatprep.subr.mxu0 0.0
        %1249 = vmatpush1.xpose.msra.mxu0 0.0
        %1250 = vmatprep.subr.mxu0 0.0
        %1251 = vmatpush1.xpose.msra.mxu0 0.0
        %1252 = vmatprep.subr.mxu0 0.0
        %1253 = vmatpush1.xpose.msra.mxu0 0.0
        %1254 = vmatprep.subr.mxu0 0.0
        %1255 = vmatpush1.xpose.msra.mxu0 0.0
        %1256 = vmatprep.subr.mxu0 0.0
        %1257 = vmatpush1.xpose.msra.mxu0 0.0
        %1258 = vmatprep.subr.mxu0 0.0
        %1259 = vmatpush1.xpose.msra.mxu0 0.0
        %1260 = vmatprep.subr.mxu0 0.0
        %1261 = vmatpush1.xpose.msra.mxu0 0.0
        %1262 = vmatprep.subr.mxu0 0.0
        %1263 = vmatpush1.xpose.msra.mxu0 0.0
        %1264 = vmatprep.mubr.f32.mxu0 0.0
        %1265 = vmatmul.mubr.f32.gmra.mrb[0].mxu0 %v1196
        %v1266 = vpop.f32.mrb[0].mxu0
        %v1267 = vadd.f32 0.0, %v1266
        %v1268 = vpop.f32.mrb[0].mxu0
        %1269 = vdwg.mxu0
        %1270 = vrot.lane.b32.xlu0 %v350, 112
        %v1271 = vpop.permute.xlu0 %1270
        %1272 = vrot.lane.b32.xlu0 %v445, 112
        %v1273 = vpop.permute.xlu0 %1272
        %v1274 = vsel %vm539, %v1271, 0
        %v1276 = vsel %vm539, %v1273, 0
        %1278 = vmatprep.subr.mxu0 0.0
        %1279 = vmatpush1.xpose.msra.mxu0 %v1276
        %1280 = vmatprep.subr.mxu0 0.0
        %1281 = vmatpush1.xpose.msra.mxu0 0.0
        %1282 = vmatprep.subr.mxu0 0.0
        %1283 = vmatpush1.xpose.msra.mxu0 0.0
        %1284 = vmatprep.subr.mxu0 0.0
        %1285 = vmatpush1.xpose.msra.mxu0 0.0
        %1286 = vmatprep.subr.mxu0 0.0
        %1287 = vmatpush1.xpose.msra.mxu0 0.0
        %1288 = vmatprep.subr.mxu0 0.0
        %1289 = vmatpush1.xpose.msra.mxu0 0.0
        %1290 = vmatprep.subr.mxu0 0.0
        %1291 = vmatpush1.xpose.msra.mxu0 0.0
        %1292 = vmatprep.subr.mxu0 0.0
        %1293 = vmatpush1.xpose.msra.mxu0 0.0
        %1294 = vmatprep.subr.mxu0 0.0
        %1295 = vmatpush1.xpose.msra.mxu0 0.0
        %1296 = vmatprep.subr.mxu0 0.0
        %1297 = vmatpush1.xpose.msra.mxu0 0.0
        %1298 = vmatprep.subr.mxu0 0.0
        %1299 = vmatpush1.xpose.msra.mxu0 0.0
        %1300 = vmatprep.subr.mxu0 0.0
        %1301 = vmatpush1.xpose.msra.mxu0 0.0
        %1302 = vmatprep.subr.mxu0 0.0
        %1303 = vmatpush1.xpose.msra.mxu0 0.0
        %1304 = vmatprep.subr.mxu0 0.0
        %1305 = vmatpush1.xpose.msra.mxu0 0.0
        %1306 = vmatprep.subr.mxu0 0.0
        %1307 = vmatpush1.xpose.msra.mxu0 0.0
        %1308 = vmatprep.subr.mxu0 0.0
        %1309 = vmatpush1.xpose.msra.mxu0 0.0
        %1310 = vmatprep.subr.mxu0 0.0
        %1311 = vmatpush1.xpose.msra.mxu0 0.0
        %1312 = vmatprep.subr.mxu0 0.0
        %1313 = vmatpush1.xpose.msra.mxu0 0.0
        %1314 = vmatprep.subr.mxu0 0.0
        %1315 = vmatpush1.xpose.msra.mxu0 0.0
        %1316 = vmatprep.subr.mxu0 0.0
        %1317 = vmatpush1.xpose.msra.mxu0 0.0
        %1318 = vmatprep.subr.mxu0 0.0
        %1319 = vmatpush1.xpose.msra.mxu0 0.0
        %1320 = vmatprep.subr.mxu0 0.0
        %1321 = vmatpush1.xpose.msra.mxu0 0.0
        %1322 = vmatprep.subr.mxu0 0.0
        %1323 = vmatpush1.xpose.msra.mxu0 0.0
        %1324 = vmatprep.subr.mxu0 0.0
        %1325 = vmatpush1.xpose.msra.mxu0 0.0
        %1326 = vmatprep.subr.mxu0 0.0
        %1327 = vmatpush1.xpose.msra.mxu0 0.0
        %1328 = vmatprep.subr.mxu0 0.0
        %1329 = vmatpush1.xpose.msra.mxu0 0.0
        %1330 = vmatprep.subr.mxu0 0.0
        %1331 = vmatpush1.xpose.msra.mxu0 0.0
        %1332 = vmatprep.subr.mxu0 0.0
        %1333 = vmatpush1.xpose.msra.mxu0 0.0
        %1334 = vmatprep.subr.mxu0 0.0
        %1335 = vmatpush1.xpose.msra.mxu0 0.0
        %1336 = vmatprep.subr.mxu0 0.0
        %1337 = vmatpush1.xpose.msra.mxu0 0.0
        %1338 = vmatprep.subr.mxu0 0.0
        %1339 = vmatpush1.xpose.msra.mxu0 0.0
        %1340 = vmatprep.subr.mxu0 0.0
        %1341 = vmatpush1.xpose.msra.mxu0 0.0
        %1342 = vmatprep.mubr.f32.mxu0 0.0
        %1343 = vmatmul.mubr.f32.gmra.mrb[0].mxu0 %v1274
        %v1344 = vpop.f32.mrb[0].mxu0
        %v1345 = vadd.f32 0.0, %v1344
        %v1346 = vpop.f32.mrb[0].mxu0
        %1347 = vdwg.mxu0
        %v1348 = vsel %vm539, %v1267, -inf
        %1349 = vmax.xlane.f32.xlu0 %v1348
        %v1350 = vpop.xlane.xlu0 %1349
        %v1351 = vsel %vm539, %v1345, -inf
        %1352 = vmax.xlane.f32.xlu0 %v1351
        %v1353 = vpop.xlane.xlu0 %1352
        %v1354 = vsub.f32 %v1267, %v1350
        %v1355 = vsub.f32 %v1345, %v1353
        %v1356 = vmul.f32 %v1354, 1.442695
        %v1357 = vpow.pop %v1356
        %v1358 = vmul.f32 %v1355, 1.442695
        %v1359 = vpow.pop %v1358
        %v1360 = vsel %vm539, %v1357, 0.0
        %1361 = vadd.xlane.f32.xlu0 %v1360
        %v1362 = vpop.xlane.xlu0 %1361
        %v1363 = vsel %vm539, %v1359, 0.0
        %1364 = vadd.xlane.f32.xlu0 %v1363
        %v1365 = vpop.xlane.xlu0 %1364
        %v1366 = vrcp.pop %v1362
        %v1367 = vmul.f32 %v1357, %v1366
        %v1368 = vrcp.pop %v1365
        %v1369 = vmul.f32 %v1359, %v1368
        %1370 = vrot.lane.b32.xlu0 %v531, 112
        %v1371 = vpop.permute.xlu0 %1370
        %v1374 = vsel %vm539, %v1367, 0
        %1376 = vmatprep.subr.mxu0 0.0
        %1377 = vmatpush1.msra.mxu0 %v1371
        %1378 = vmatprep.subr.mxu0 0.0
        %1379 = vmatpush1.msra.mxu0 0.0
        %1380 = vmatprep.subr.mxu0 0.0
        %1381 = vmatpush1.msra.mxu0 0.0
        %1382 = vmatprep.subr.mxu0 0.0
        %1383 = vmatpush1.msra.mxu0 0.0
        %1384 = vmatprep.subr.mxu0 0.0
        %1385 = vmatpush1.msra.mxu0 0.0
        %1386 = vmatprep.subr.mxu0 0.0
        %1387 = vmatpush1.msra.mxu0 0.0
        %1388 = vmatprep.subr.mxu0 0.0
        %1389 = vmatpush1.msra.mxu0 0.0
        %1390 = vmatprep.subr.mxu0 0.0
        %1391 = vmatpush1.msra.mxu0 0.0
        %1392 = vmatprep.subr.mxu0 0.0
        %1393 = vmatpush1.msra.mxu0 0.0
        %1394 = vmatprep.subr.mxu0 0.0
        %1395 = vmatpush1.msra.mxu0 0.0
        %1396 = vmatprep.subr.mxu0 0.0
        %1397 = vmatpush1.msra.mxu0 0.0
        %1398 = vmatprep.subr.mxu0 0.0
        %1399 = vmatpush1.msra.mxu0 0.0
        %1400 = vmatprep.subr.mxu0 0.0
        %1401 = vmatpush1.msra.mxu0 0.0
        %1402 = vmatprep.subr.mxu0 0.0
        %1403 = vmatpush1.msra.mxu0 0.0
        %1404 = vmatprep.subr.mxu0 0.0
        %1405 = vmatpush1.msra.mxu0 0.0
        %1406 = vmatprep.subr.mxu0 0.0
        %1407 = vmatpush1.msra.mxu0 0.0
        %1408 = vmatprep.subr.mxu0 0.0
        %1409 = vmatpush1.msra.mxu0 0.0
        %1410 = vmatprep.subr.mxu0 0.0
        %1411 = vmatpush1.msra.mxu0 0.0
        %1412 = vmatprep.subr.mxu0 0.0
        %1413 = vmatpush1.msra.mxu0 0.0
        %1414 = vmatprep.subr.mxu0 0.0
        %1415 = vmatpush1.msra.mxu0 0.0
        %1416 = vmatprep.subr.mxu0 0.0
        %1417 = vmatpush1.msra.mxu0 0.0
        %1418 = vmatprep.subr.mxu0 0.0
        %1419 = vmatpush1.msra.mxu0 0.0
        %1420 = vmatprep.subr.mxu0 0.0
        %1421 = vmatpush1.msra.mxu0 0.0
        %1422 = vmatprep.subr.mxu0 0.0
        %1423 = vmatpush1.msra.mxu0 0.0
        %1424 = vmatprep.subr.mxu0 0.0
        %1425 = vmatpush1.msra.mxu0 0.0
        %1426 = vmatprep.subr.mxu0 0.0
        %1427 = vmatpush1.msra.mxu0 0.0
        %1428 = vmatprep.subr.mxu0 0.0
        %1429 = vmatpush1.msra.mxu0 0.0
        %1430 = vmatprep.subr.mxu0 0.0
        %1431 = vmatpush1.msra.mxu0 0.0
        %1432 = vmatprep.subr.mxu0 0.0
        %1433 = vmatpush1.msra.mxu0 0.0
        %1434 = vmatprep.subr.mxu0 0.0
        %1435 = vmatpush1.msra.mxu0 0.0
        %1436 = vmatprep.subr.mxu0 0.0
        %1437 = vmatpush1.msra.mxu0 0.0
        %1438 = vmatprep.subr.mxu0 0.0
        %1439 = vmatpush1.msra.mxu0 0.0
        %1440 = vmatprep.mubr.f32.mxu0 0.0
        %1441 = vmatmul.mubr.f32.gmra.mrb[0].mxu0 %v1374
        %v1442 = vpop.f32.mrb[0].mxu0
        %v1443 = vadd.f32 0.0, %v1442
        %v1444 = vpop.f32.mrb[0].mxu0
        %1445 = vdwg.mxu0
        %1446 = vrot.lane.b32.xlu0 %v536, 112
        %v1447 = vpop.permute.xlu0 %1446
        %v1450 = vsel %vm539, %v1369, 0
        %1452 = vmatprep.subr.mxu0 0.0
        %1453 = vmatpush1.msra.mxu0 %v1447
        %1454 = vmatprep.subr.mxu0 0.0
        %1455 = vmatpush1.msra.mxu0 0.0
        %1456 = vmatprep.subr.mxu0 0.0
        %1457 = vmatpush1.msra.mxu0 0.0
        %1458 = vmatprep.subr.mxu0 0.0
        %1459 = vmatpush1.msra.mxu0 0.0
        %1460 = vmatprep.subr.mxu0 0.0
        %1461 = vmatpush1.msra.mxu0 0.0
        %1462 = vmatprep.subr.mxu0 0.0
        %1463 = vmatpush1.msra.mxu0 0.0
        %1464 = vmatprep.subr.mxu0 0.0
        %1465 = vmatpush1.msra.mxu0 0.0
        %1466 = vmatprep.subr.mxu0 0.0
        %1467 = vmatpush1.msra.mxu0 0.0
        %1468 = vmatprep.subr.mxu0 0.0
        %1469 = vmatpush1.msra.mxu0 0.0
        %1470 = vmatprep.subr.mxu0 0.0
        %1471 = vmatpush1.msra.mxu0 0.0
        %1472 = vmatprep.subr.mxu0 0.0
        %1473 = vmatpush1.msra.mxu0 0.0
        %1474 = vmatprep.subr.mxu0 0.0
        %1475 = vmatpush1.msra.mxu0 0.0
        %1476 = vmatprep.subr.mxu0 0.0
        %1477 = vmatpush1.msra.mxu0 0.0
        %1478 = vmatprep.subr.mxu0 0.0
        %1479 = vmatpush1.msra.mxu0 0.0
        %1480 = vmatprep.subr.mxu0 0.0
        %1481 = vmatpush1.msra.mxu0 0.0
        %1482 = vmatprep.subr.mxu0 0.0
        %1483 = vmatpush1.msra.mxu0 0.0
        %1484 = vmatprep.subr.mxu0 0.0
        %1485 = vmatpush1.msra.mxu0 0.0
        %1486 = vmatprep.subr.mxu0 0.0
        %1487 = vmatpush1.msra.mxu0 0.0
        %1488 = vmatprep.subr.mxu0 0.0
        %1489 = vmatpush1.msra.mxu0 0.0
        %1490 = vmatprep.subr.mxu0 0.0
        %1491 = vmatpush1.msra.mxu0 0.0
        %1492 = vmatprep.subr.mxu0 0.0
        %1493 = vmatpush1.msra.mxu0 0.0
        %1494 = vmatprep.subr.mxu0 0.0
        %1495 = vmatpush1.msra.mxu0 0.0
        %1496 = vmatprep.subr.mxu0 0.0
        %1497 = vmatpush1.msra.mxu0 0.0
        %1498 = vmatprep.subr.mxu0 0.0
        %1499 = vmatpush1.msra.mxu0 0.0
        %1500 = vmatprep.subr.mxu0 0.0
        %1501 = vmatpush1.msra.mxu0 0.0
        %1502 = vmatprep.subr.mxu0 0.0
        %1503 = vmatpush1.msra.mxu0 0.0
        %1504 = vmatprep.subr.mxu0 0.0
        %1505 = vmatpush1.msra.mxu0 0.0
        %1506 = vmatprep.subr.mxu0 0.0
        %1507 = vmatpush1.msra.mxu0 0.0
        %1508 = vmatprep.subr.mxu0 0.0
        %1509 = vmatpush1.msra.mxu0 0.0
        %1510 = vmatprep.subr.mxu0 0.0
        %1511 = vmatpush1.msra.mxu0 0.0
        %1512 = vmatprep.subr.mxu0 0.0
        %1513 = vmatpush1.msra.mxu0 0.0
        %1514 = vmatprep.subr.mxu0 0.0
        %1515 = vmatpush1.msra.mxu0 0.0
        %1516 = vmatprep.mubr.f32.mxu0 0.0
        %1517 = vmatmul.mubr.f32.gmra.mrb[0].mxu0 %v1450
        %v1518 = vpop.f32.mrb[0].mxu0
        %v1519 = vadd.f32 0.0, %v1518
        %v1520 = vpop.f32.mrb[0].mxu0
        %1521 = vdwg.mxu0
        %1522 = vrot.lane.b32.xlu0 %v349, 104
        %v1523 = vpop.permute.xlu0 %1522
        %1524 = vrot.lane.b32.xlu0 %v440, 104
        %v1525 = vpop.permute.xlu0 %1524
        %v1526 = vsel %vm539, %v1523, 0
        %v1528 = vsel %vm539, %v1525, 0
        %1530 = vmatprep.subr.mxu0 0.0
        %1531 = vmatpush1.xpose.msra.mxu0 %v1528
        %1532 = vmatprep.subr.mxu0 0.0
        %1533 = vmatpush1.xpose.msra.mxu0 0.0
        %1534 = vmatprep.subr.mxu0 0.0
        %1535 = vmatpush1.xpose.msra.mxu0 0.0
        %1536 = vmatprep.subr.mxu0 0.0
        %1537 = vmatpush1.xpose.msra.mxu0 0.0
        %1538 = vmatprep.subr.mxu0 0.0
        %1539 = vmatpush1.xpose.msra.mxu0 0.0
        %1540 = vmatprep.subr.mxu0 0.0
        %1541 = vmatpush1.xpose.msra.mxu0 0.0
        %1542 = vmatprep.subr.mxu0 0.0
        %1543 = vmatpush1.xpose.msra.mxu0 0.0
        %1544 = vmatprep.subr.mxu0 0.0
        %1545 = vmatpush1.xpose.msra.mxu0 0.0
        %1546 = vmatprep.subr.mxu0 0.0
        %1547 = vmatpush1.xpose.msra.mxu0 0.0
        %1548 = vmatprep.subr.mxu0 0.0
        %1549 = vmatpush1.xpose.msra.mxu0 0.0
        %1550 = vmatprep.subr.mxu0 0.0
        %1551 = vmatpush1.xpose.msra.mxu0 0.0
        %1552 = vmatprep.subr.mxu0 0.0
        %1553 = vmatpush1.xpose.msra.mxu0 0.0
        %1554 = vmatprep.subr.mxu0 0.0
        %1555 = vmatpush1.xpose.msra.mxu0 0.0
        %1556 = vmatprep.subr.mxu0 0.0
        %1557 = vmatpush1.xpose.msra.mxu0 0.0
        %1558 = vmatprep.subr.mxu0 0.0
        %1559 = vmatpush1.xpose.msra.mxu0 0.0
        %1560 = vmatprep.subr.mxu0 0.0
        %1561 = vmatpush1.xpose.msra.mxu0 0.0
        %1562 = vmatprep.subr.mxu0 0.0
        %1563 = vmatpush1.xpose.msra.mxu0 0.0
        %1564 = vmatprep.subr.mxu0 0.0
        %1565 = vmatpush1.xpose.msra.mxu0 0.0
        %1566 = vmatprep.subr.mxu0 0.0
        %1567 = vmatpush1.xpose.msra.mxu0 0.0
        %1568 = vmatprep.subr.mxu0 0.0
        %1569 = vmatpush1.xpose.msra.mxu0 0.0
        %1570 = vmatprep.subr.mxu0 0.0
        %1571 = vmatpush1.xpose.msra.mxu0 0.0
        %1572 = vmatprep.subr.mxu0 0.0
        %1573 = vmatpush1.xpose.msra.mxu0 0.0
        %1574 = vmatprep.subr.mxu0 0.0
        %1575 = vmatpush1.xpose.msra.mxu0 0.0
        %1576 = vmatprep.subr.mxu0 0.0
        %1577 = vmatpush1.xpose.msra.mxu0 0.0
        %1578 = vmatprep.subr.mxu0 0.0
        %1579 = vmatpush1.xpose.msra.mxu0 0.0
        %1580 = vmatprep.subr.mxu0 0.0
        %1581 = vmatpush1.xpose.msra.mxu0 0.0
        %1582 = vmatprep.subr.mxu0 0.0
        %1583 = vmatpush1.xpose.msra.mxu0 0.0
        %1584 = vmatprep.subr.mxu0 0.0
        %1585 = vmatpush1.xpose.msra.mxu0 0.0
        %1586 = vmatprep.subr.mxu0 0.0
        %1587 = vmatpush1.xpose.msra.mxu0 0.0
        %1588 = vmatprep.subr.mxu0 0.0
        %1589 = vmatpush1.xpose.msra.mxu0 0.0
        %1590 = vmatprep.subr.mxu0 0.0
        %1591 = vmatpush1.xpose.msra.mxu0 0.0
        %1592 = vmatprep.subr.mxu0 0.0
        %1593 = vmatpush1.xpose.msra.mxu0 0.0
        %1594 = vmatprep.mubr.f32.mxu0 0.0
        %1595 = vmatmul.mubr.f32.gmra.mrb[0].mxu0 %v1526
        %v1596 = vpop.f32.mrb[0].mxu0
        %v1597 = vadd.f32 0.0, %v1596
        %v1598 = vpop.f32.mrb[0].mxu0
        %1599 = vdwg.mxu0
        %1600 = vrot.lane.b32.xlu0 %v350, 104
        %v1601 = vpop.permute.xlu0 %1600
        %1602 = vrot.lane.b32.xlu0 %v445, 104
        %v1603 = vpop.permute.xlu0 %1602
        %v1604 = vsel %vm539, %v1601, 0
        %v1606 = vsel %vm539, %v1603, 0
        %1608 = vmatprep.subr.mxu0 0.0
        %1609 = vmatpush1.xpose.msra.mxu0 %v1606
        %1610 = vmatprep.subr.mxu0 0.0
        %1611 = vmatpush1.xpose.msra.mxu0 0.0
        %1612 = vmatprep.subr.mxu0 0.0
        %1613 = vmatpush1.xpose.msra.mxu0 0.0
        %1614 = vmatprep.subr.mxu0 0.0
        %1615 = vmatpush1.xpose.msra.mxu0 0.0
        %1616 = vmatprep.subr.mxu0 0.0
        %1617 = vmatpush1.xpose.msra.mxu0 0.0
        %1618 = vmatprep.subr.mxu0 0.0
        %1619 = vmatpush1.xpose.msra.mxu0 0.0
        %1620 = vmatprep.subr.mxu0 0.0
        %1621 = vmatpush1.xpose.msra.mxu0 0.0
        %1622 = vmatprep.subr.mxu0 0.0
        %1623 = vmatpush1.xpose.msra.mxu0 0.0
        %1624 = vmatprep.subr.mxu0 0.0
        %1625 = vmatpush1.xpose.msra.mxu0 0.0
        %1626 = vmatprep.subr.mxu0 0.0
        %1627 = vmatpush1.xpose.msra.mxu0 0.0
        %1628 = vmatprep.subr.mxu0 0.0
        %1629 = vmatpush1.xpose.msra.mxu0 0.0
        %1630 = vmatprep.subr.mxu0 0.0
        %1631 = vmatpush1.xpose.msra.mxu0 0.0
        %1632 = vmatprep.subr.mxu0 0.0
        %1633 = vmatpush1.xpose.msra.mxu0 0.0
        %1634 = vmatprep.subr.mxu0 0.0
        %1635 = vmatpush1.xpose.msra.mxu0 0.0
        %1636 = vmatprep.subr.mxu0 0.0
        %1637 = vmatpush1.xpose.msra.mxu0 0.0
        %1638 = vmatprep.subr.mxu0 0.0
        %1639 = vmatpush1.xpose.msra.mxu0 0.0
        %1640 = vmatprep.subr.mxu0 0.0
        %1641 = vmatpush1.xpose.msra.mxu0 0.0
        %1642 = vmatprep.subr.mxu0 0.0
        %1643 = vmatpush1.xpose.msra.mxu0 0.0
        %1644 = vmatprep.subr.mxu0 0.0
        %1645 = vmatpush1.xpose.msra.mxu0 0.0
        %1646 = vmatprep.subr.mxu0 0.0
        %1647 = vmatpush1.xpose.msra.mxu0 0.0
        %1648 = vmatprep.subr.mxu0 0.0
        %1649 = vmatpush1.xpose.msra.mxu0 0.0
        %1650 = vmatprep.subr.mxu0 0.0
        %1651 = vmatpush1.xpose.msra.mxu0 0.0
        %1652 = vmatprep.subr.mxu0 0.0
        %1653 = vmatpush1.xpose.msra.mxu0 0.0
        %1654 = vmatprep.subr.mxu0 0.0
        %1655 = vmatpush1.xpose.msra.mxu0 0.0
        %1656 = vmatprep.subr.mxu0 0.0
        %1657 = vmatpush1.xpose.msra.mxu0 0.0
        %1658 = vmatprep.subr.mxu0 0.0
        %1659 = vmatpush1.xpose.msra.mxu0 0.0
        %1660 = vmatprep.subr.mxu0 0.0
        %1661 = vmatpush1.xpose.msra.mxu0 0.0
        %1662 = vmatprep.subr.mxu0 0.0
        %1663 = vmatpush1.xpose.msra.mxu0 0.0
        %1664 = vmatprep.subr.mxu0 0.0
        %1665 = vmatpush1.xpose.msra.mxu0 0.0
        %1666 = vmatprep.subr.mxu0 0.0
        %1667 = vmatpush1.xpose.msra.mxu0 0.0
        %1668 = vmatprep.subr.mxu0 0.0
        %1669 = vmatpush1.xpose.msra.mxu0 0.0
        %1670 = vmatprep.subr.mxu0 0.0
        %1671 = vmatpush1.xpose.msra.mxu0 0.0
        %1672 = vmatprep.mubr.f32.mxu0 0.0
        %1673 = vmatmul.mubr.f32.gmra.mrb[0].mxu0 %v1604
        %v1674 = vpop.f32.mrb[0].mxu0
        %v1675 = vadd.f32 0.0, %v1674
        %v1676 = vpop.f32.mrb[0].mxu0
        %1677 = vdwg.mxu0
        %v1678 = vsel %vm539, %v1597, -inf
        %1679 = vmax.xlane.f32.xlu0 %v1678
        %v1680 = vpop.xlane.xlu0 %1679
        %v1681 = vsel %vm539, %v1675, -inf
        %1682 = vmax.xlane.f32.xlu0 %v1681
        %v1683 = vpop.xlane.xlu0 %1682
        %v1684 = vsub.f32 %v1597, %v1680
        %v1685 = vsub.f32 %v1675, %v1683
        %v1686 = vmul.f32 %v1684, 1.442695
        %v1687 = vpow.pop %v1686
        %v1688 = vmul.f32 %v1685, 1.442695
        %v1689 = vpow.pop %v1688
        %v1690 = vsel %vm539, %v1687, 0.0
        %1691 = vadd.xlane.f32.xlu0 %v1690
        %v1692 = vpop.xlane.xlu0 %1691
        %v1693 = vsel %vm539, %v1689, 0.0
        %1694 = vadd.xlane.f32.xlu0 %v1693
        %v1695 = vpop.xlane.xlu0 %1694
        %v1696 = vrcp.pop %v1692
        %v1697 = vmul.f32 %v1687, %v1696
        %v1698 = vrcp.pop %v1695
        %v1699 = vmul.f32 %v1689, %v1698
        %1700 = vrot.lane.b32.xlu0 %v531, 104
        %v1701 = vpop.permute.xlu0 %1700
        %v1704 = vsel %vm539, %v1697, 0
        %1706 = vmatprep.subr.mxu0 0.0
        %1707 = vmatpush1.msra.mxu0 %v1701
        %1708 = vmatprep.subr.mxu0 0.0
        %1709 = vmatpush1.msra.mxu0 0.0
        %1710 = vmatprep.subr.mxu0 0.0
        %1711 = vmatpush1.msra.mxu0 0.0
        %1712 = vmatprep.subr.mxu0 0.0
        %1713 = vmatpush1.msra.mxu0 0.0
        %1714 = vmatprep.subr.mxu0 0.0
        %1715 = vmatpush1.msra.mxu0 0.0
        %1716 = vmatprep.subr.mxu0 0.0
        %1717 = vmatpush1.msra.mxu0 0.0
        %1718 = vmatprep.subr.mxu0 0.0
        %1719 = vmatpush1.msra.mxu0 0.0
        %1720 = vmatprep.subr.mxu0 0.0
        %1721 = vmatpush1.msra.mxu0 0.0
        %1722 = vmatprep.subr.mxu0 0.0
        %1723 = vmatpush1.msra.mxu0 0.0
        %1724 = vmatprep.subr.mxu0 0.0
        %1725 = vmatpush1.msra.mxu0 0.0
        %1726 = vmatprep.subr.mxu0 0.0
        %1727 = vmatpush1.msra.mxu0 0.0
        %1728 = vmatprep.subr.mxu0 0.0
        %1729 = vmatpush1.msra.mxu0 0.0
        %1730 = vmatprep.subr.mxu0 0.0
        %1731 = vmatpush1.msra.mxu0 0.0
        %1732 = vmatprep.subr.mxu0 0.0
        %1733 = vmatpush1.msra.mxu0 0.0
        %1734 = vmatprep.subr.mxu0 0.0
        %1735 = vmatpush1.msra.mxu0 0.0
        %1736 = vmatprep.subr.mxu0 0.0
        %1737 = vmatpush1.msra.mxu0 0.0
        %1738 = vmatprep.subr.mxu0 0.0
        %1739 = vmatpush1.msra.mxu0 0.0
        %1740 = vmatprep.subr.mxu0 0.0
        %1741 = vmatpush1.msra.mxu0 0.0
        %1742 = vmatprep.subr.mxu0 0.0
        %1743 = vmatpush1.msra.mxu0 0.0
        %1744 = vmatprep.subr.mxu0 0.0
        %1745 = vmatpush1.msra.mxu0 0.0
        %1746 = vmatprep.subr.mxu0 0.0
        %1747 = vmatpush1.msra.mxu0 0.0
        %1748 = vmatprep.subr.mxu0 0.0
        %1749 = vmatpush1.msra.mxu0 0.0
        %1750 = vmatprep.subr.mxu0 0.0
        %1751 = vmatpush1.msra.mxu0 0.0
        %1752 = vmatprep.subr.mxu0 0.0
        %1753 = vmatpush1.msra.mxu0 0.0
        %1754 = vmatprep.subr.mxu0 0.0
        %1755 = vmatpush1.msra.mxu0 0.0
        %1756 = vmatprep.subr.mxu0 0.0
        %1757 = vmatpush1.msra.mxu0 0.0
        %1758 = vmatprep.subr.mxu0 0.0
        %1759 = vmatpush1.msra.mxu0 0.0
        %1760 = vmatprep.subr.mxu0 0.0
        %1761 = vmatpush1.msra.mxu0 0.0
        %1762 = vmatprep.subr.mxu0 0.0
        %1763 = vmatpush1.msra.mxu0 0.0
        %1764 = vmatprep.subr.mxu0 0.0
        %1765 = vmatpush1.msra.mxu0 0.0
        %1766 = vmatprep.subr.mxu0 0.0
        %1767 = vmatpush1.msra.mxu0 0.0
        %1768 = vmatprep.subr.mxu0 0.0
        %1769 = vmatpush1.msra.mxu0 0.0
        %1770 = vmatprep.mubr.f32.mxu0 0.0
        %1771 = vmatmul.mubr.f32.gmra.mrb[0].mxu0 %v1704
        %v1772 = vpop.f32.mrb[0].mxu0
        %v1773 = vadd.f32 0.0, %v1772
        %v1774 = vpop.f32.mrb[0].mxu0
        %1775 = vdwg.mxu0
        %1776 = vrot.lane.b32.xlu0 %v536, 104
        %v1777 = vpop.permute.xlu0 %1776
        %v1780 = vsel %vm539, %v1699, 0
        %1782 = vmatprep.subr.mxu0 0.0
        %1783 = vmatpush1.msra.mxu0 %v1777
        %1784 = vmatprep.subr.mxu0 0.0
        %1785 = vmatpush1.msra.mxu0 0.0
        %1786 = vmatprep.subr.mxu0 0.0
        %1787 = vmatpush1.msra.mxu0 0.0
        %1788 = vmatprep.subr.mxu0 0.0
        %1789 = vmatpush1.msra.mxu0 0.0
        %1790 = vmatprep.subr.mxu0 0.0
        %1791 = vmatpush1.msra.mxu0 0.0
        %1792 = vmatprep.subr.mxu0 0.0
        %1793 = vmatpush1.msra.mxu0 0.0
        %1794 = vmatprep.subr.mxu0 0.0
        %1795 = vmatpush1.msra.mxu0 0.0
        %1796 = vmatprep.subr.mxu0 0.0
        %1797 = vmatpush1.msra.mxu0 0.0
        %1798 = vmatprep.subr.mxu0 0.0
        %1799 = vmatpush1.msra.mxu0 0.0
        %1800 = vmatprep.subr.mxu0 0.0
        %1801 = vmatpush1.msra.mxu0 0.0
        %1802 = vmatprep.subr.mxu0 0.0
        %1803 = vmatpush1.msra.mxu0 0.0
        %1804 = vmatprep.subr.mxu0 0.0
        %1805 = vmatpush1.msra.mxu0 0.0
        %1806 = vmatprep.subr.mxu0 0.0
        %1807 = vmatpush1.msra.mxu0 0.0
        %1808 = vmatprep.subr.mxu0 0.0
        %1809 = vmatpush1.msra.mxu0 0.0
        %1810 = vmatprep.subr.mxu0 0.0
        %1811 = vmatpush1.msra.mxu0 0.0
        %1812 = vmatprep.subr.mxu0 0.0
        %1813 = vmatpush1.msra.mxu0 0.0
        %1814 = vmatprep.subr.mxu0 0.0
        %1815 = vmatpush1.msra.mxu0 0.0
        %1816 = vmatprep.subr.mxu0 0.0
        %1817 = vmatpush1.msra.mxu0 0.0
        %1818 = vmatprep.subr.mxu0 0.0
        %1819 = vmatpush1.msra.mxu0 0.0
        %1820 = vmatprep.subr.mxu0 0.0
        %1821 = vmatpush1.msra.mxu0 0.0
        %1822 = vmatprep.subr.mxu0 0.0
        %1823 = vmatpush1.msra.mxu0 0.0
        %1824 = vmatprep.subr.mxu0 0.0
        %1825 = vmatpush1.msra.mxu0 0.0
        %1826 = vmatprep.subr.mxu0 0.0
        %1827 = vmatpush1.msra.mxu0 0.0
        %1828 = vmatprep.subr.mxu0 0.0
        %1829 = vmatpush1.msra.mxu0 0.0
        %1830 = vmatprep.subr.mxu0 0.0
        %1831 = vmatpush1.msra.mxu0 0.0
        %1832 = vmatprep.subr.mxu0 0.0
        %1833 = vmatpush1.msra.mxu0 0.0
        %1834 = vmatprep.subr.mxu0 0.0
        %1835 = vmatpush1.msra.mxu0 0.0
        %1836 = vmatprep.subr.mxu0 0.0
        %1837 = vmatpush1.msra.mxu0 0.0
        %1838 = vmatprep.subr.mxu0 0.0
        %1839 = vmatpush1.msra.mxu0 0.0
        %1840 = vmatprep.subr.mxu0 0.0
        %1841 = vmatpush1.msra.mxu0 0.0
        %1842 = vmatprep.subr.mxu0 0.0
        %1843 = vmatpush1.msra.mxu0 0.0
        %1844 = vmatprep.subr.mxu0 0.0
        %1845 = vmatpush1.msra.mxu0 0.0
        %1846 = vmatprep.mubr.f32.mxu0 0.0
        %1847 = vmatmul.mubr.f32.gmra.mrb[0].mxu0 %v1780
        %v1848 = vpop.f32.mrb[0].mxu0
        %v1849 = vadd.f32 0.0, %v1848
        %v1850 = vpop.f32.mrb[0].mxu0
        %1851 = vdwg.mxu0
        %1854 = vrot.lane.b32.xlu0 %v1112, 8
        %v1855 = vpop.permute.xlu0 %1854
        %1856 = vrot.lane.b32.xlu0 %v1189, 8
        %v1857 = vpop.permute.xlu0 %1856
        %1862 = vrot.lane.b32.xlu0 %v1443, 16
        %v1863 = vpop.permute.xlu0 %1862
        %1864 = vrot.lane.b32.xlu0 %v1519, 16
        %v1865 = vpop.permute.xlu0 %1864
        %1870 = vrot.lane.b32.xlu0 %v1773, 24
        %v1871 = vpop.permute.xlu0 %1870
        %1872 = vrot.lane.b32.xlu0 %v1849, 24
        %v1873 = vpop.permute.xlu0 %1872
        %v1876 = vsel %vm539, %v784, %v1855
        %v1877 = vsel %vm539, %v857, %v1857
        %v1878 = vsel %vm255, %v1876, %v1863
        %v1879 = vsel %vm255, %v1877, %v1865
        %vm1880 = vcmask 195584
        %v1881 = vsel %vm1880, %v1878, %v1871
        %v1882 = vsel %vm1880, %v1879, %v1873
        %v1883 = vcombine.high %v1881, 0.0
        %v1885 = vunpack.c.l.s4 1983009808
        %v1886 = vunpack.c.0.s8 %v1885
        %v1887 = vlaneseq
        %v1888 = vshrl.u32 %v1887, 7
        %v1889 = vsub.s32 %v1886, %v1888
        %v1890 = vrot.slane %v1881, %v1889
        %v1892 = vunpack.c.l.s4 1983009808
        %v1893 = vunpack.c.0.s8 %v1892
        %v1894 = vlaneseq
        %v1895 = vshrl.u32 %v1894, 7
        %v1896 = vsub.s32 %v1893, %v1895
        %v1897 = vrot.slane %v1883, %v1896
        %v1898 = vcombine.high %v1882, 0.0
        %v1900 = vunpack.c.l.s4 1983009808
        %v1901 = vunpack.c.0.s8 %v1900
        %v1902 = vlaneseq
        %v1903 = vshrl.u32 %v1902, 7
        %v1904 = vsub.s32 %v1901, %v1903
        %v1905 = vrot.slane %v1882, %v1904
        %v1907 = vunpack.c.l.s4 1983009808
        %v1908 = vunpack.c.0.s8 %v1907
        %v1909 = vlaneseq
        %v1910 = vshrl.u32 %v1909, 7
        %v1911 = vsub.s32 %v1908, %v1910
        %v1912 = vrot.slane %v1898, %v1911
        %v1913 = vcombine.low %v1890, %v1905
        %v1914 = vcombine.high %v1890, %v1905
        %v1916 = vunpack.c.l.s4 1934713408
        %v1917 = vunpack.c.0.s8 %v1916
        %v1918 = vlaneseq
        %v1919 = vshrl.u32 %v1918, 7
        %v1920 = vsub.s32 %v1917, %v1919
        %v1921 = vrot.slane %v1913, %v1920
        %v1923 = vunpack.c.l.s4 1934713408
        %v1924 = vunpack.c.0.s8 %v1923
        %v1925 = vlaneseq
        %v1926 = vshrl.u32 %v1925, 7
        %v1927 = vsub.s32 %v1924, %v1926
        %v1928 = vrot.slane %v1914, %v1927
        %v1929 = vcombine.low %v1897, %v1912
        %v1930 = vcombine.high %v1897, %v1912
        %v1932 = vunpack.c.l.s4 1934713408
        %v1933 = vunpack.c.0.s8 %v1932
        %v1934 = vlaneseq
        %v1935 = vshrl.u32 %v1934, 7
        %v1936 = vsub.s32 %v1933, %v1935
        %v1937 = vrot.slane %v1929, %v1936
        %v1939 = vunpack.c.l.s4 1934713408
        %v1940 = vunpack.c.0.s8 %v1939
        %v1941 = vlaneseq
        %v1942 = vshrl.u32 %v1941, 7
        %v1943 = vsub.s32 %v1940, %v1942
        %v1944 = vrot.slane %v1930, %v1943
        %v1945 = vcombine.high %v1921, 0.0
        %v1946 = vcombine.high %v1928, 0.0
        %v1947 = vcombine.high %v1937, 0.0
        %v1948 = vcombine.high %v1944, 0.0
        %1950 = vrot.lane.b32.xlu0 %v1945, 32
        %v1951 = vpop.permute.xlu0 %1950
        %1954 = vrot.lane.b32.xlu0 %v1928, 64
        %v1955 = vpop.permute.xlu0 %1954
        %1958 = vrot.lane.b32.xlu0 %v1946, 96
        %v1959 = vpop.permute.xlu0 %1958
        %1962 = vrot.lane.b32.xlu0 %v1947, 32
        %v1963 = vpop.permute.xlu0 %1962
        %1966 = vrot.lane.b32.xlu0 %v1944, 64
        %v1967 = vpop.permute.xlu0 %1966
        %1970 = vrot.lane.b32.xlu0 %v1948, 96
        %v1971 = vpop.permute.xlu0 %1970
        %vm1973 = vcmask 261120
        %v1974 = vsel %vm1973, %v1921, %v1951
        %vm1975 = vcmask 523264
        %v1976 = vsel %vm1975, %v1974, %v1955
        %vm1977 = vcmask 785408
        %v1978 = vsel %vm1977, %v1976, %v1959
        %v1979 = vsel %vm1973, %v1937, %v1963
        %v1980 = vsel %vm1975, %v1979, %v1967
        %v1981 = vsel %vm1977, %v1980, %v1971
        %v1984 = vcombine.low %v1978, %v1981
        %v1986 = vunpack.c.l.s4 1983009808
        %v1987 = vunpack.c.0.s8 %v1986
        %v1988 = vlaneseq
        %v1989 = vshrl.u32 %v1988, 7
        %v1990 = vsub.s32 %v1987, %v1989
        %v1991 = vrot.slane %v1984, %v1990
        %1993 = vst [vmem:[%s234] sm:$0xf] %v1991
        %s1994 = sand.u32 %s142, 1
        %s1995 = scalar_lea.sflag [#allocation3], %s1994
        %s1996 = sand.u32 %s142, 1
        %s1997 = smul.addr %s1996, 4
        %s1998 = scalar_lea.vmem [#allocation2], %s1997
        // Predicated region
        $region41: #{tpu_custom_call.1} parent=39 // pred_check
          %p1999 = pneg %p152
        $region42: #{tpu_custom_call.1} parent=39 // pred_check_branch
          %2001 = sbr.rel (%p1999) target = $region44
        $region43: #{tpu_custom_call.1} parent=39 // pred_region
          %s2003 = ssub.s32 64, 64
          %2004 = vsyncadd %s1995, %s2003
          %s2005 = smul.addr %s19, 2
          %s2006 = smul.addr %s2005, 32
          %s2007 = scalar_lea.hbm %s5, %s2006
          %s2009 = sshll.u32 %s1998, 4
          %s2010 = int_to_ptr.vmem [resolvable:$true] %s2009
          %2012 = dma.vmem_to_hbm [thread:$0]  %s2010, 64, %s2007, %s1995
        $region44: #{tpu_custom_call.1} parent=39 // pred_fallthru
          _
      $region40: #{tpu_custom_call.1} parent=5 // pred_fallthru
        _
      %p2013 = scmp.le.s32.totalorder 2, %s14
      // Predicated region
      $region45: #{tpu_custom_call.1} parent=5 // pred_check
        %p2014 = pneg %p2013
      $region46: #{tpu_custom_call.1} parent=5 // pred_check_branch
        %2016 = sbr.rel (%p2014) target = $region48
      $region47: #{tpu_custom_call.1} parent=5 // pred_region
        %s2017 = ssub.s32 %s14, 2
        // Predicated region
        $region49: #{tpu_custom_call.1} parent=47 // pred_check
          %p2018 = pneg %p158
        $region50: #{tpu_custom_call.1} parent=47 // pred_check_branch
          %2020 = sbr.rel (%p2018) target = $region52
        $region51: #{tpu_custom_call.1} parent=47 // pred_region
          %s2021 = sand.u32 %s143, 1
          %s2022 = scalar_lea.sflag [#allocation3], %s2021
          %s2023 = sand.u32 %s143, 1
          %s2024 = smul.addr %s2023, 4
          %s2025 = scalar_lea.vmem [#allocation2], %s2024
          %2026 = dma.done %s2022, 64
        $region52: #{tpu_custom_call.1} parent=47 // pred_fallthru
          _
      $region48: #{tpu_custom_call.1} parent=5 // pred_fallthru
        _
    $region6: #{tpu_custom_call.1} parent=1 // loop_footer
      %s18 = sadd.s32 1, %s14
    $region7: #{tpu_custom_call.1} parent=1 // loop_footer_branch
      %13 = sbr.rel target = $region3
    $region8: #{tpu_custom_call.1} parent=1 // loop_exit
      _
    %2027 = vsyncpa [#allocation3], 1
    %s2028 = scalar_lea.sflag [#allocation3], 1
    %2029 = vsyncpa %s2028, 1

</llo_original>
